<compile_context>
chip_gen: v6e
topology: v6e:2x2x1
jax: 0.10.0
libtpu: 0.0.40
codegen_flags: <defaults>
</compile_context>

<pallas_src>
import functools

import jax
import jax.numpy as jnp
from jax import lax
from jax.experimental import pallas as pl
from jax.experimental.pallas import tpu as pltpu

# ----------------------------- config (small synthetic) -----------------------------
BATCH = 2
SEQ = 8
HIDDEN = 32
NUM_HEADS = 4
NUM_KV_HEADS = 2
HEAD_DIM = HIDDEN // NUM_HEADS          # 8
INTERMEDIATE = 64
RMS_EPS = 1e-6
ROPE_THETA = 10000.0


# ----------------------------- in-kernel helpers -----------------------------
def _rmsnorm(x, w):
    var = jnp.mean(x * x, axis=-1, keepdims=True)
    return x * lax.rsqrt(var + RMS_EPS) * w


# ----------------------------- fused decoder-layer kernel -----------------------------
def decoder_layer_kernel(x_ref, ln1_ref, wqkv_ref, bqkv_ref,
                         cos_ref, sins_ref, mask_ref, wo_ref,
                         ln2_ref, wgu_ref, br_ref, wd_ref,
                         o_ref, *, bb):
    x = x_ref[...]                                    # [T, H] (T = bb * S rows)
    D = HEAD_DIM
    NQ = NUM_HEADS * D
    NK = NUM_KV_HEADS * D
    group = NUM_HEADS // NUM_KV_HEADS
    half = D // 2
    scale = 1.0 / (D ** 0.5)
    I = INTERMEDIATE

    # ---- input_layernorm + fused Q/K/V projection (one matmul, bias added once) ----
    xn = _rmsnorm(x, ln1_ref[...])
    qkv = jnp.dot(xn, wqkv_ref[...], preferred_element_type=jnp.float32) + bqkv_ref[...]
    q = qkv[:, :NQ]                                   # [T, 32]
    k = qkv[:, NQ:NQ + NK]                            # [T, 16]
    v = qkv[:, NQ + NK:]                              # [T, 16]

    # ---- rotary: lane-slice swap, sign pre-folded into the sin table (no MXU) ----
    if bb > 1:
        cos_b = jnp.concatenate([cos_ref[...]] * bb, axis=0)      # [T, D]
        sin_b = jnp.concatenate([sins_ref[...]] * bb, axis=0)     # [T, D] (signed)
    else:
        cos_b = cos_ref[...]
        sin_b = sins_ref[...]

    def rope(t):   # t: [..., T, D]
        rot = jnp.concatenate([t[..., half:], t[..., :half]], axis=-1)
        return t * cos_b + rot * sin_b

    # ---- stack heads once: q -> [NH, T, D]; kv heads rotated/sliced once (GQA re-use) ----
    q3 = jnp.stack([q[:, h * D:(h + 1) * D] for h in range(NUM_HEADS)], axis=0)
    q3 = rope(q3) * scale
    k_sl = [rope(k[:, j * D:(j + 1) * D]) for j in range(NUM_KV_HEADS)]
    v_sl = [v[:, j * D:(j + 1) * D] for j in range(NUM_KV_HEADS)]
    k3 = jnp.stack([k_sl[h // group] for h in range(NUM_HEADS)], axis=0)   # [NH, T, D]
    v3 = jnp.stack([v_sl[h // group] for h in range(NUM_HEADS)], axis=0)   # [NH, T, D]

    # ---- batched attention over the head axis (single masked softmax pass) ----
    s = jnp.einsum('hqd,hkd->hqk', q3, k3, preferred_element_type=jnp.float32)
    s = s + mask_ref[...]                             # block-diag causal bias [T, T]
    s = s - jnp.max(s, axis=-1, keepdims=True)
    p = jnp.exp(s)
    p = p * pl.reciprocal(jnp.sum(p, axis=-1, keepdims=True), approx=True)
    ctx3 = jnp.einsum('hqk,hkd->hqd', p, v3, preferred_element_type=jnp.float32)
    ctx = jnp.concatenate([ctx3[h] for h in range(NUM_HEADS)], axis=-1)    # [T, NQ], in vregs

    # ---- single o_proj matmul + first residual ----
    h1 = x + jnp.dot(ctx, wo_ref[...], preferred_element_type=jnp.float32)

    # ---- post_attention_layernorm + fused gate/up/router matmul ----
    hn = _rmsnorm(h1, ln2_ref[...])
    gu = jnp.dot(hn, wgu_ref[...], preferred_element_type=jnp.float32)     # [T, 4I+128]
    g1 = gu[:, 0 * I:1 * I]
    u1 = gu[:, 1 * I:2 * I]
    g2 = gu[:, 2 * I:3 * I]
    u2 = gu[:, 3 * I:4 * I]
    logits = gu[:, 4 * I:4 * I + 2] + br_ref[...]                          # router logits
    # argmax(softmax(logits)) == argmax(logits); ties -> expert 0 (torch first-max)
    m1 = (logits[:, 0:1] >= logits[:, 1:2]).astype(jnp.float32)
    m2 = 1.0 - m1

    # ---- both experts masked, activations kept in vregs and lane-concatenated ----
    a1 = m1 * (g1 * jax.nn.sigmoid(g1) * u1)          # SiLU(gate)*up, masked
    a2 = m2 * (g2 * jax.nn.sigmoid(g2) * u2)
    act = jnp.concatenate([a1, a2], axis=-1)          # [T, 2I]
    moe = jnp.dot(act, wd_ref[...], preferred_element_type=jnp.float32)    # [T, H]

    # ---- second residual; single store per grid step ----
    o_ref[...] = h1 + moe


# ----------------------------- wrapper -----------------------------
def _rep(a):
    n = a.ndim
    return pl.BlockSpec(a.shape, lambda i, _n=n: (0,) * _n)


def _tensorcores_per_chip():
    """Best-effort: 2 TensorCores per chip on v7x, else 1 (v5e/v6e)."""
    try:
        kind = jax.devices()[0].device_kind.lower()
    except Exception:
        return 1
    return 2 if ("v7" in kind or "7x" in kind) else 1


def qwen2_moe_decoder_layer(x, p, cos, sin):
    B, S, H = x.shape
    D = HEAD_DIM

    # grid: one step per TensorCore (v7x gets a 2-wide CORE_PARALLEL grid; v5e/v6e fold
    # the whole batch into a single lane/sublane-dense step).
    tc = _tensorcores_per_chip()
    num_steps = tc if (tc > 1 and B % tc == 0) else 1
    BB = B // num_steps
    T = BB * S

    # ---- parameter-setup glue (pure JAX, outside the kernel) ----
    wqkv = jnp.concatenate([p["wq"], p["wk"], p["wv"]], axis=1)            # [H, 64]
    bqkv = jnp.concatenate([p["bq"], p["bk"], p["bv"]], axis=1)            # [1, 64]
    # router columns folded into the stacked gate/up weights, padded to a 128 multiple
    wgu = jnp.concatenate(
        [p["g1"], p["u1"], p["g2"], p["u2"], p["wr"].T,
         jnp.zeros((H, 128 - 2), jnp.float32)], axis=1)                    # [H, 4I+128]
    wd = jnp.concatenate([p["d1"], p["d2"]], axis=0)                       # [2I, H]

    # sign of rotate_half folded into the sin table: rot = [x2, x1], sin_s = [-sin, +sin]
    sign = jnp.concatenate([-jnp.ones((1, D // 2), jnp.float32),
                            jnp.ones((1, D // 2), jnp.float32)], axis=1)
    sin_s = sin * sign                                                     # [S, D]

    # block-diagonal causal mask over the BB batches folded into one grid step (additive)
    r = jnp.arange(T)
    allowed = (r[:, None] // S == r[None, :] // S) & (r[:, None] >= r[None, :])
    mask_bias = jnp.where(allowed, 0.0, -1e30).astype(jnp.float32)         # [T, T]

    xf = x.reshape(B * S, H)
    x_spec = pl.BlockSpec((T, H), lambda i: (i, 0))

    if num_steps > 1:
        dims = (pltpu.CORE_PARALLEL,)   # actually shard the batch-split grid on v7x's 2 TCs
    else:
        dims = ("arbitrary",)

    out = pl.pallas_call(
        functools.partial(decoder_layer_kernel, bb=BB),
        out_shape=jax.ShapeDtypeStruct((B * S, H), jnp.float32),
        grid_spec=pltpu.PrefetchScalarGridSpec(
            num_scalar_prefetch=0, grid=(num_steps,),
            in_specs=[x_spec,
                      _rep(p["ln1_w"]), _rep(wqkv), _rep(bqkv),
                      _rep(cos), _rep(sin_s), _rep(mask_bias), _rep(p["wo"]),
                      _rep(p["ln2_w"]), _rep(wgu), _rep(p["br"]), _rep(wd)],
            out_specs=x_spec),
        compiler_params=pltpu.CompilerParams(dimension_semantics=dims),
    )(xf, p["ln1_w"], wqkv, bqkv, cos, sin_s, mask_bias, p["wo"],
      p["ln2_w"], wgu, p["br"], wd)

    return out.reshape(B, S, H)


# ----------------------------- glue: rotary tables -----------------------------
def rotary_cos_sin(S, D, theta=ROPE_THETA):
    inv_freq = 1.0 / (theta ** (jnp.arange(0, D, 2, dtype=jnp.float32) / D))
    pos = jnp.arange(S, dtype=jnp.float32)
    freqs = jnp.outer(pos, inv_freq)                      # [S, D/2]
    emb = jnp.concatenate([freqs, freqs], axis=-1)        # [S, D]
    return jnp.cos(emb), jnp.sin(emb)


# ----------------------------- pure-JAX reference (sanity check) -----------------------------
def reference(x, p, cos, sin):
    def rmsnorm(t, w):
        var = jnp.mean(t * t, axis=-1, keepdims=True)
        return t * lax.rsqrt(var + RMS_EPS) * w

    def rotate_half(t):
        half = t.shape[-1] // 2
        return jnp.concatenate([-t[..., half:], t[..., :half]], axis=-1)

    B, S, H = x.shape
    xn = rmsnorm(x, p["ln1_w"][0])
    q = (xn @ p["wq"] + p["bq"][0]).reshape(B, S, NUM_HEADS, HEAD_DIM).transpose(0, 2, 1, 3)
    k = (xn @ p["wk"] + p["bk"][0]).reshape(B, S, NUM_KV_HEADS, HEAD_DIM).transpose(0, 2, 1, 3)
    v = (xn @ p["wv"] + p["bv"][0]).reshape(B, S, NUM_KV_HEADS, HEAD_DIM).transpose(0, 2, 1, 3)
    c = cos[None, None]
    s = sin[None, None]
    q = q * c + rotate_half(q) * s
    k = k * c + rotate_half(k) * s
    group = NUM_HEADS // NUM_KV_HEADS
    k = jnp.repeat(k, group, axis=1)
    v = jnp.repeat(v, group, axis=1)
    scores = jnp.einsum("bhqd,bhkd->bhqk", q, k) / (HEAD_DIM ** 0.5)
    causal = jnp.tril(jnp.ones((S, S), bool))
    scores = jnp.where(causal[None, None], scores, -1e30)
    probs = jax.nn.softmax(scores, axis=-1)
    attn = jnp.einsum("bhqk,bhkd->bhqd", probs, v).transpose(0, 2, 1, 3).reshape(B, S, NUM_HEADS * HEAD_DIM)
    h = x + attn @ p["wo"]

    hn = rmsnorm(h, p["ln2_w"][0])
    logits = hn @ p["wr"].T + p["br"][0]
    choice = jnp.argmax(jax.nn.softmax(logits, axis=-1), axis=-1)
    m1 = (choice == 0)[..., None].astype(jnp.float32)
    m2 = (choice == 1)[..., None].astype(jnp.float32)

    def mlp(t, g, u, d):
        gate = t @ g
        return (gate * jax.nn.sigmoid(gate) * (t @ u)) @ d

    moe = m1 * mlp(hn, p["g1"], p["u1"], p["d1"]) + m2 * mlp(hn, p["g2"], p["u2"], p["d2"])
    return h + moe


# ----------------------------- main -----------------------------
if __name__ == "__main__":
    key = jax.random.PRNGKey(0)
    ks = jax.random.split(key, 18)

    def w(k, shape, scale=0.05):
        return (scale * jax.random.normal(k, shape)).astype(jnp.float32)

    params = dict(
        ln1_w=(1.0 + 0.05 * jax.random.normal(ks[0], (1, HIDDEN))).astype(jnp.float32),
        ln2_w=(1.0 + 0.05 * jax.random.normal(ks[1], (1, HIDDEN))).astype(jnp.float32),
        wq=w(ks[2], (HIDDEN, NUM_HEADS * HEAD_DIM)),
        bq=w(ks[3], (1, NUM_HEADS * HEAD_DIM)),
        wk=w(ks[4], (HIDDEN, NUM_KV_HEADS * HEAD_DIM)),
        bk=w(ks[5], (1, NUM_KV_HEADS * HEAD_DIM)),
        wv=w(ks[6], (HIDDEN, NUM_KV_HEADS * HEAD_DIM)),
        bv=w(ks[7], (1, NUM_KV_HEADS * HEAD_DIM)),
        wo=w(ks[8], (NUM_HEADS * HEAD_DIM, HIDDEN)),
        wr=w(ks[9], (2, HIDDEN)),
        br=w(ks[10], (1, 2)),
        g1=w(ks[11], (HIDDEN, INTERMEDIATE)),
        u1=w(ks[12], (HIDDEN, INTERMEDIATE)),
        d1=w(ks[13], (INTERMEDIATE, HIDDEN)),
        g2=w(ks[14], (HIDDEN, INTERMEDIATE)),
        u2=w(ks[15], (HIDDEN, INTERMEDIATE)),
        d2=w(ks[16], (INTERMEDIATE, HIDDEN)),
    )
    x = jax.random.normal(ks[17], (BATCH, SEQ, HIDDEN), dtype=jnp.float32)

    cos, sin = rotary_cos_sin(SEQ, HEAD_DIM)

    out = qwen2_moe_decoder_layer(x, params, cos, sin)
    out = jax.block_until_ready(out)

    ref = reference(x, params, cos, sin)
    assert out.shape == (BATCH, SEQ, HIDDEN)
    # tolerance covers the approx reciprocal in the softmax (EUP vrcp); everything else is f32
    assert jnp.allclose(out, ref, atol=2e-3, rtol=2e-3), float(jnp.max(jnp.abs(out - ref)))

    print("KERNEL_OK")
</pallas_src>

<mosaic_0001>
module attributes {stable_mosaic.version = 11 : i64} {
  func.func @decoder_layer_kernel(%arg0: i32, %arg1: memref<16x32xf32, #tpu.memory_space<vmem>>, %arg2: memref<1x32xf32, #tpu.memory_space<vmem>>, %arg3: memref<32x64xf32, #tpu.memory_space<vmem>>, %arg4: memref<1x64xf32, #tpu.memory_space<vmem>>, %arg5: memref<8x8xf32, #tpu.memory_space<vmem>>, %arg6: memref<8x8xf32, #tpu.memory_space<vmem>>, %arg7: memref<16x16xf32, #tpu.memory_space<vmem>>, %arg8: memref<32x32xf32, #tpu.memory_space<vmem>>, %arg9: memref<1x32xf32, #tpu.memory_space<vmem>>, %arg10: memref<32x384xf32, #tpu.memory_space<vmem>>, %arg11: memref<1x2xf32, #tpu.memory_space<vmem>>, %arg12: memref<128x32xf32, #tpu.memory_space<vmem>>, %arg13: memref<16x32xf32, #tpu.memory_space<vmem>>) attributes {dimension_semantics = [#tpu.dimension_semantics<arbitrary>], iteration_bounds = array<i64: 1>, scalar_prefetch = 0 : i64, scratch_operands = 0 : i64, tpu.core_type = #tpu.core_type<tc>, window_params = [{transform_indices = @transform_0, window_bounds = array<i64: 16, 32>}, {pipeline_mode = #tpu.pipeline_mode<synchronous>, transform_indices = @transform_1, window_bounds = array<i64: 1, 32>}, {pipeline_mode = #tpu.pipeline_mode<synchronous>, transform_indices = @transform_2, window_bounds = array<i64: 32, 64>}, {pipeline_mode = #tpu.pipeline_mode<synchronous>, transform_indices = @transform_3, window_bounds = array<i64: 1, 64>}, {pipeline_mode = #tpu.pipeline_mode<synchronous>, transform_indices = @transform_4, window_bounds = array<i64: 8, 8>}, {pipeline_mode = #tpu.pipeline_mode<synchronous>, transform_indices = @transform_5, window_bounds = array<i64: 8, 8>}, {pipeline_mode = #tpu.pipeline_mode<synchronous>, transform_indices = @transform_6, window_bounds = array<i64: 16, 16>}, {pipeline_mode = #tpu.pipeline_mode<synchronous>, transform_indices = @transform_7, window_bounds = array<i64: 32, 32>}, {pipeline_mode = #tpu.pipeline_mode<synchronous>, transform_indices = @transform_8, window_bounds = array<i64: 1, 32>}, {pipeline_mode = #tpu.pipeline_mode<synchronous>, transform_indices = @transform_9, window_bounds = array<i64: 32, 384>}, {pipeline_mode = #tpu.pipeline_mode<synchronous>, transform_indices = @transform_10, window_bounds = array<i64: 1, 2>}, {pipeline_mode = #tpu.pipeline_mode<synchronous>, transform_indices = @transform_11, window_bounds = array<i64: 128, 32>}, {transform_indices = @transform_12, window_bounds = array<i64: 16, 32>}]} {
    %c0 = arith.constant 0 : index
    %c0_0 = arith.constant 0 : index
    %0 = vector.load %arg1[%c0, %c0_0] : memref<16x32xf32, #tpu.memory_space<vmem>>, vector<16x32xf32>
    %c0_1 = arith.constant 0 : index
    %c0_2 = arith.constant 0 : index
    %1 = vector.load %arg2[%c0_1, %c0_2] : memref<1x32xf32, #tpu.memory_space<vmem>>, vector<1x32xf32>
    %2 = arith.mulf %0, %0 : vector<16x32xf32>
    %cst = arith.constant dense<0.000000e+00> : vector<16xf32>
    %3 = vector.multi_reduction <add>, %2, %cst [1] : vector<16x32xf32> to vector<16xf32>
    %4 = vector.shape_cast %3 : vector<16xf32> to vector<16x1xf32>
    %cst_3 = arith.constant 3.200000e+01 : f32
    %5 = vector.broadcast %cst_3 : f32 to vector<16x1xf32>
    %6 = arith.divf %4, %5 : vector<16x1xf32>
    %cst_4 = arith.constant 9.99999997E-7 : f32
    %7 = vector.broadcast %cst_4 : f32 to vector<16x1xf32>
    %8 = arith.addf %6, %7 : vector<16x1xf32>
    %9 = math.rsqrt %8 : vector<16x1xf32>
    %10 = vector.broadcast %9 : vector<16x1xf32> to vector<16x32xf32>
    %11 = arith.mulf %0, %10 : vector<16x32xf32>
    %12 = vector.broadcast %1 : vector<1x32xf32> to vector<16x32xf32>
    %13 = arith.mulf %11, %12 : vector<16x32xf32>
    %c0_5 = arith.constant 0 : index
    %c0_6 = arith.constant 0 : index
    %14 = vector.load %arg3[%c0_5, %c0_6] : memref<32x64xf32, #tpu.memory_space<vmem>>, vector<32x64xf32>
    %cst_7 = arith.constant dense<0.000000e+00> : vector<16x64xf32>
    %15 = tpu.matmul %13, %14, %cst_7 {dimension_numbers = #tpu.dot_dimension_numbers<[1], [0], [0], [1], [0, 0, 1, 1], [], []>} : vector<16x32xf32>, vector<32x64xf32>, vector<16x64xf32> -> vector<16x64xf32>
    %c0_8 = arith.constant 0 : index
    %c0_9 = arith.constant 0 : index
    %16 = vector.load %arg4[%c0_8, %c0_9] : memref<1x64xf32, #tpu.memory_space<vmem>>, vector<1x64xf32>
    %17 = vector.broadcast %16 : vector<1x64xf32> to vector<16x64xf32>
    %18 = arith.addf %15, %17 : vector<16x64xf32>
    %19 = vector.extract_strided_slice %18 {offsets = [0, 0], sizes = [16, 32], strides = [1, 1]} : vector<16x64xf32> to vector<16x32xf32>
    %20 = vector.extract_strided_slice %18 {offsets = [0, 32], sizes = [16, 16], strides = [1, 1]} : vector<16x64xf32> to vector<16x16xf32>
    %21 = vector.extract_strided_slice %18 {offsets = [0, 48], sizes = [16, 16], strides = [1, 1]} : vector<16x64xf32> to vector<16x16xf32>
    %c0_10 = arith.constant 0 : index
    %c0_11 = arith.constant 0 : index
    %22 = vector.load %arg5[%c0_10, %c0_11] : memref<8x8xf32, #tpu.memory_space<vmem>>, vector<8x8xf32>
    %23 = tpu.concatenate %22, %22 in 0 : vector<8x8xf32>, vector<8x8xf32> -> vector<16x8xf32>
    %c0_12 = arith.constant 0 : index
    %c0_13 = arith.constant 0 : index
    %24 = vector.load %arg6[%c0_12, %c0_13] : memref<8x8xf32, #tpu.memory_space<vmem>>, vector<8x8xf32>
    %25 = tpu.concatenate %24, %24 in 0 : vector<8x8xf32>, vector<8x8xf32> -> vector<16x8xf32>
    %26 = vector.extract_strided_slice %19 {offsets = [0, 0], sizes = [16, 8], strides = [1, 1]} : vector<16x32xf32> to vector<16x8xf32>
    %27 = vector.extract_strided_slice %19 {offsets = [0, 8], sizes = [16, 8], strides = [1, 1]} : vector<16x32xf32> to vector<16x8xf32>
    %28 = vector.extract_strided_slice %19 {offsets = [0, 16], sizes = [16, 8], strides = [1, 1]} : vector<16x32xf32> to vector<16x8xf32>
    %29 = vector.extract_strided_slice %19 {offsets = [0, 24], sizes = [16, 8], strides = [1, 1]} : vector<16x32xf32> to vector<16x8xf32>
    %30 = vector.shape_cast %26 : vector<16x8xf32> to vector<1x16x8xf32>
    %31 = vector.shape_cast %27 : vector<16x8xf32> to vector<1x16x8xf32>
    %32 = vector.shape_cast %28 : vector<16x8xf32> to vector<1x16x8xf32>
    %33 = vector.shape_cast %29 : vector<16x8xf32> to vector<1x16x8xf32>
    %34 = tpu.concatenate %30, %31, %32, %33 in 0 : vector<1x16x8xf32>, vector<1x16x8xf32>, vector<1x16x8xf32>, vector<1x16x8xf32> -> vector<4x16x8xf32>
    %35 = vector.extract_strided_slice %34 {offsets = [0, 0, 4], sizes = [4, 16, 4], strides = [1, 1, 1]} : vector<4x16x8xf32> to vector<4x16x4xf32>
    %36 = vector.extract_strided_slice %34 {offsets = [0, 0, 0], sizes = [4, 16, 4], strides = [1, 1, 1]} : vector<4x16x8xf32> to vector<4x16x4xf32>
    %37 = tpu.concatenate %35, %36 in 2 : vector<4x16x4xf32>, vector<4x16x4xf32> -> vector<4x16x8xf32>
    %38 = vector.shape_cast %23 : vector<16x8xf32> to vector<1x16x8xf32>
    %39 = vector.broadcast %38 : vector<1x16x8xf32> to vector<4x16x8xf32>
    %40 = arith.mulf %34, %39 : vector<4x16x8xf32>
    %41 = vector.shape_cast %25 : vector<16x8xf32> to vector<1x16x8xf32>
    %42 = vector.broadcast %41 : vector<1x16x8xf32> to vector<4x16x8xf32>
    %43 = arith.mulf %37, %42 : vector<4x16x8xf32>
    %44 = arith.addf %40, %43 : vector<4x16x8xf32>
    %cst_14 = arith.constant 0.353553385 : f32
    %45 = vector.broadcast %cst_14 : f32 to vector<4x16x8xf32>
    %46 = arith.mulf %44, %45 : vector<4x16x8xf32>
    %47 = vector.extract_strided_slice %20 {offsets = [0, 0], sizes = [16, 8], strides = [1, 1]} : vector<16x16xf32> to vector<16x8xf32>
    %48 = vector.extract_strided_slice %47 {offsets = [0, 4], sizes = [16, 4], strides = [1, 1]} : vector<16x8xf32> to vector<16x4xf32>
    %49 = vector.extract_strided_slice %47 {offsets = [0, 0], sizes = [16, 4], strides = [1, 1]} : vector<16x8xf32> to vector<16x4xf32>
    %50 = tpu.concatenate %48, %49 in 1 : vector<16x4xf32>, vector<16x4xf32> -> vector<16x8xf32>
    %51 = arith.mulf %47, %23 : vector<16x8xf32>
    %52 = arith.mulf %50, %25 : vector<16x8xf32>
    %53 = arith.addf %51, %52 : vector<16x8xf32>
    %54 = vector.extract_strided_slice %20 {offsets = [0, 8], sizes = [16, 8], strides = [1, 1]} : vector<16x16xf32> to vector<16x8xf32>
    %55 = vector.extract_strided_slice %54 {offsets = [0, 4], sizes = [16, 4], strides = [1, 1]} : vector<16x8xf32> to vector<16x4xf32>
    %56 = vector.extract_strided_slice %54 {offsets = [0, 0], sizes = [16, 4], strides = [1, 1]} : vector<16x8xf32> to vector<16x4xf32>
    %57 = tpu.concatenate %55, %56 in 1 : vector<16x4xf32>, vector<16x4xf32> -> vector<16x8xf32>
    %58 = arith.mulf %54, %23 : vector<16x8xf32>
    %59 = arith.mulf %57, %25 : vector<16x8xf32>
    %60 = arith.addf %58, %59 : vector<16x8xf32>
    %61 = vector.extract_strided_slice %21 {offsets = [0, 0], sizes = [16, 8], strides = [1, 1]} : vector<16x16xf32> to vector<16x8xf32>
    %62 = vector.extract_strided_slice %21 {offsets = [0, 8], sizes = [16, 8], strides = [1, 1]} : vector<16x16xf32> to vector<16x8xf32>
    %63 = vector.shape_cast %53 : vector<16x8xf32> to vector<1x16x8xf32>
    %64 = vector.shape_cast %53 : vector<16x8xf32> to vector<1x16x8xf32>
    %65 = vector.shape_cast %60 : vector<16x8xf32> to vector<1x16x8xf32>
    %66 = vector.shape_cast %60 : vector<16x8xf32> to vector<1x16x8xf32>
    %67 = tpu.concatenate %63, %64, %65, %66 in 0 : vector<1x16x8xf32>, vector<1x16x8xf32>, vector<1x16x8xf32>, vector<1x16x8xf32> -> vector<4x16x8xf32>
    %68 = vector.shape_cast %61 : vector<16x8xf32> to vector<1x16x8xf32>
    %69 = vector.shape_cast %61 : vector<16x8xf32> to vector<1x16x8xf32>
    %70 = vector.shape_cast %62 : vector<16x8xf32> to vector<1x16x8xf32>
    %71 = vector.shape_cast %62 : vector<16x8xf32> to vector<1x16x8xf32>
    %72 = tpu.concatenate %68, %69, %70, %71 in 0 : vector<1x16x8xf32>, vector<1x16x8xf32>, vector<1x16x8xf32>, vector<1x16x8xf32> -> vector<4x16x8xf32>
    "tpu.trace_start"() <{level = 10 : i32, message = "hqd,hkd->hqk"}> : () -> ()
    %cst_15 = arith.constant dense<0.000000e+00> : vector<4x16x16xf32>
    %73 = tpu.matmul %46, %67, %cst_15 {dimension_numbers = #tpu.dot_dimension_numbers<[2], [2], [1], [1], [0, 0, 0, 1, 1, 1], [0], [0]>} : vector<4x16x8xf32>, vector<4x16x8xf32>, vector<4x16x16xf32> -> vector<4x16x16xf32>
    "tpu.trace_stop"() : () -> ()
    %c0_16 = arith.constant 0 : index
    %c0_17 = arith.constant 0 : index
    %74 = vector.load %arg7[%c0_16, %c0_17] : memref<16x16xf32, #tpu.memory_space<vmem>>, vector<16x16xf32>
    %75 = vector.shape_cast %74 : vector<16x16xf32> to vector<1x16x16xf32>
    %76 = vector.broadcast %75 : vector<1x16x16xf32> to vector<4x16x16xf32>
    %77 = arith.addf %73, %76 : vector<4x16x16xf32>
    %cst_18 = arith.constant dense<0xFF800000> : vector<4x16xf32>
    %78 = vector.multi_reduction <maximumf>, %77, %cst_18 [2] : vector<4x16x16xf32> to vector<4x16xf32>
    %79 = vector.shape_cast %78 : vector<4x16xf32> to vector<4x16x1xf32>
    %80 = vector.broadcast %79 : vector<4x16x1xf32> to vector<4x16x16xf32>
    %81 = arith.subf %77, %80 : vector<4x16x16xf32>
    %82 = math.exp %81 : vector<4x16x16xf32>
    %cst_19 = arith.constant dense<0.000000e+00> : vector<4x16xf32>
    %83 = vector.multi_reduction <add>, %82, %cst_19 [2] : vector<4x16x16xf32> to vector<4x16xf32>
    %84 = vector.shape_cast %83 : vector<4x16xf32> to vector<4x16x1xf32>
    %85 = tpu.reciprocal %84 {approx = true} : vector<4x16x1xf32> -> vector<4x16x1xf32>
    %86 = vector.broadcast %85 : vector<4x16x1xf32> to vector<4x16x16xf32>
    %87 = arith.mulf %82, %86 : vector<4x16x16xf32>
    "tpu.trace_start"() <{level = 10 : i32, message = "hqk,hkd->hqd"}> : () -> ()
    %cst_20 = arith.constant dense<0.000000e+00> : vector<4x16x8xf32>
    %88 = tpu.matmul %87, %72, %cst_20 {dimension_numbers = #tpu.dot_dimension_numbers<[2], [1], [1], [2], [0, 0, 0, 1, 1, 2], [0], [0]>} : vector<4x16x16xf32>, vector<4x16x8xf32>, vector<4x16x8xf32> -> vector<4x16x8xf32>
    "tpu.trace_stop"() : () -> ()
    %89 = vector.extract_strided_slice %88 {offsets = [0, 0, 0], sizes = [1, 16, 8], strides = [1, 1, 1]} : vector<4x16x8xf32> to vector<1x16x8xf32>
    %90 = vector.shape_cast %89 : vector<1x16x8xf32> to vector<16x8xf32>
    %91 = vector.extract_strided_slice %88 {offsets = [1, 0, 0], sizes = [1, 16, 8], strides = [1, 1, 1]} : vector<4x16x8xf32> to vector<1x16x8xf32>
    %92 = vector.shape_cast %91 : vector<1x16x8xf32> to vector<16x8xf32>
    %93 = vector.extract_strided_slice %88 {offsets = [2, 0, 0], sizes = [1, 16, 8], strides = [1, 1, 1]} : vector<4x16x8xf32> to vector<1x16x8xf32>
    %94 = vector.shape_cast %93 : vector<1x16x8xf32> to vector<16x8xf32>
    %95 = vector.extract_strided_slice %88 {offsets = [3, 0, 0], sizes = [1, 16, 8], strides = [1, 1, 1]} : vector<4x16x8xf32> to vector<1x16x8xf32>
    %96 = vector.shape_cast %95 : vector<1x16x8xf32> to vector<16x8xf32>
    %97 = tpu.concatenate %90, %92, %94, %96 in 1 : vector<16x8xf32>, vector<16x8xf32>, vector<16x8xf32>, vector<16x8xf32> -> vector<16x32xf32>
    %c0_21 = arith.constant 0 : index
    %c0_22 = arith.constant 0 : index
    %98 = vector.load %arg8[%c0_21, %c0_22] : memref<32x32xf32, #tpu.memory_space<vmem>>, vector<32x32xf32>
    %cst_23 = arith.constant dense<0.000000e+00> : vector<16x32xf32>
    %99 = tpu.matmul %97, %98, %cst_23 {dimension_numbers = #tpu.dot_dimension_numbers<[1], [0], [0], [1], [0, 0, 1, 1], [], []>} : vector<16x32xf32>, vector<32x32xf32>, vector<16x32xf32> -> vector<16x32xf32>
    %100 = arith.addf %0, %99 : vector<16x32xf32>
    %c0_24 = arith.constant 0 : index
    %c0_25 = arith.constant 0 : index
    %101 = vector.load %arg9[%c0_24, %c0_25] : memref<1x32xf32, #tpu.memory_space<vmem>>, vector<1x32xf32>
    %102 = arith.mulf %100, %100 : vector<16x32xf32>
    %cst_26 = arith.constant dense<0.000000e+00> : vector<16xf32>
    %103 = vector.multi_reduction <add>, %102, %cst_26 [1] : vector<16x32xf32> to vector<16xf32>
    %104 = vector.shape_cast %103 : vector<16xf32> to vector<16x1xf32>
    %cst_27 = arith.constant 3.200000e+01 : f32
    %105 = vector.broadcast %cst_27 : f32 to vector<16x1xf32>
    %106 = arith.divf %104, %105 : vector<16x1xf32>
    %cst_28 = arith.constant 9.99999997E-7 : f32
    %107 = vector.broadcast %cst_28 : f32 to vector<16x1xf32>
    %108 = arith.addf %106, %107 : vector<16x1xf32>
    %109 = math.rsqrt %108 : vector<16x1xf32>
    %110 = vector.broadcast %109 : vector<16x1xf32> to vector<16x32xf32>
    %111 = arith.mulf %100, %110 : vector<16x32xf32>
    %112 = vector.broadcast %101 : vector<1x32xf32> to vector<16x32xf32>
    %113 = arith.mulf %111, %112 : vector<16x32xf32>
    %c0_29 = arith.constant 0 : index
    %c0_30 = arith.constant 0 : index
    %114 = vector.load %arg10[%c0_29, %c0_30] : memref<32x384xf32, #tpu.memory_space<vmem>>, vector<32x384xf32>
    %cst_31 = arith.constant dense<0.000000e+00> : vector<16x384xf32>
    %115 = tpu.matmul %113, %114, %cst_31 {dimension_numbers = #tpu.dot_dimension_numbers<[1], [0], [0], [1], [0, 0, 1, 1], [], []>} : vector<16x32xf32>, vector<32x384xf32>, vector<16x384xf32> -> vector<16x384xf32>
    %116 = vector.extract_strided_slice %115 {offsets = [0, 0], sizes = [16, 64], strides = [1, 1]} : vector<16x384xf32> to vector<16x64xf32>
    %117 = vector.extract_strided_slice %115 {offsets = [0, 64], sizes = [16, 64], strides = [1, 1]} : vector<16x384xf32> to vector<16x64xf32>
    %118 = vector.extract_strided_slice %115 {offsets = [0, 128], sizes = [16, 64], strides = [1, 1]} : vector<16x384xf32> to vector<16x64xf32>
    %119 = vector.extract_strided_slice %115 {offsets = [0, 192], sizes = [16, 64], strides = [1, 1]} : vector<16x384xf32> to vector<16x64xf32>
    %120 = vector.extract_strided_slice %115 {offsets = [0, 256], sizes = [16, 2], strides = [1, 1]} : vector<16x384xf32> to vector<16x2xf32>
    %c0_32 = arith.constant 0 : index
    %c0_33 = arith.constant 0 : index
    %121 = vector.load %arg11[%c0_32, %c0_33] : memref<1x2xf32, #tpu.memory_space<vmem>>, vector<1x2xf32>
    %122 = vector.broadcast %121 : vector<1x2xf32> to vector<16x2xf32>
    %123 = arith.addf %120, %122 : vector<16x2xf32>
    %124 = vector.extract_strided_slice %123 {offsets = [0, 0], sizes = [16, 1], strides = [1, 1]} : vector<16x2xf32> to vector<16x1xf32>
    %125 = vector.extract_strided_slice %123 {offsets = [0, 1], sizes = [16, 1], strides = [1, 1]} : vector<16x2xf32> to vector<16x1xf32>
    %126 = arith.cmpf oge, %124, %125 : vector<16x1xf32>
    %127 = arith.extui %126 : vector<16x1xi1> to vector<16x1xi32>
    %128 = arith.sitofp %127 : vector<16x1xi32> to vector<16x1xf32>
    %cst_34 = arith.constant 1.000000e+00 : f32
    %129 = vector.broadcast %cst_34 : f32 to vector<16x1xf32>
    %130 = arith.subf %129, %128 : vector<16x1xf32>
    %131 = arith.negf %116 : vector<16x64xf32>
    %132 = math.exp %131 : vector<16x64xf32>
    %cst_35 = arith.constant 1.000000e+00 : f32
    %133 = vector.broadcast %cst_35 : f32 to vector<16x64xf32>
    %134 = arith.addf %133, %132 : vector<16x64xf32>
    %135 = arith.divf %133, %134 : vector<16x64xf32>
    %136 = arith.mulf %116, %135 : vector<16x64xf32>
    %137 = arith.mulf %136, %117 : vector<16x64xf32>
    %138 = vector.broadcast %128 : vector<16x1xf32> to vector<16x64xf32>
    %139 = arith.mulf %138, %137 : vector<16x64xf32>
    %140 = arith.negf %118 : vector<16x64xf32>
    %141 = math.exp %140 : vector<16x64xf32>
    %cst_36 = arith.constant 1.000000e+00 : f32
    %142 = vector.broadcast %cst_36 : f32 to vector<16x64xf32>
    %143 = arith.addf %142, %141 : vector<16x64xf32>
    %144 = arith.divf %142, %143 : vector<16x64xf32>
    %145 = arith.mulf %118, %144 : vector<16x64xf32>
    %146 = arith.mulf %145, %119 : vector<16x64xf32>
    %147 = vector.broadcast %130 : vector<16x1xf32> to vector<16x64xf32>
    %148 = arith.mulf %147, %146 : vector<16x64xf32>
    %149 = tpu.concatenate %139, %148 in 1 : vector<16x64xf32>, vector<16x64xf32> -> vector<16x128xf32>
    %c0_37 = arith.constant 0 : index
    %c0_38 = arith.constant 0 : index
    %150 = vector.load %arg12[%c0_37, %c0_38] : memref<128x32xf32, #tpu.memory_space<vmem>>, vector<128x32xf32>
    %cst_39 = arith.constant dense<0.000000e+00> : vector<16x32xf32>
    %151 = tpu.matmul %149, %150, %cst_39 {dimension_numbers = #tpu.dot_dimension_numbers<[1], [0], [0], [1], [0, 0, 1, 1], [], []>} : vector<16x128xf32>, vector<128x32xf32>, vector<16x32xf32> -> vector<16x32xf32>
    %152 = arith.addf %100, %151 : vector<16x32xf32>
    %c0_40 = arith.constant 0 : index
    %c0_41 = arith.constant 0 : index
    %153 = vector.load %arg13[%c0_40, %c0_41] : memref<16x32xf32, #tpu.memory_space<vmem>>, vector<16x32xf32>
    tpu.vector_store %arg13[%c0_40, %c0_41], %152 {strides = array<i32>} : memref<16x32xf32, #tpu.memory_space<vmem>>, vector<16x32xf32>,
    return
  }
  func.func @transform_0(%arg0: i32) -> (i32, i32) {
    %c0_i32 = arith.constant 0 : i32
    %c0_i32_0 = arith.constant 0 : i32
    return %arg0, %c0_i32 : i32, i32
  }
  func.func @transform_1(%arg0: i32) -> (i32, i32) {
    %c0_i32 = arith.constant 0 : i32
    %c0_i32_0 = arith.constant 0 : i32
    %c0_i32_1 = arith.constant 0 : i32
    return %c0_i32, %c0_i32_0 : i32, i32
  }
  func.func @transform_2(%arg0: i32) -> (i32, i32) {
    %c0_i32 = arith.constant 0 : i32
    %c0_i32_0 = arith.constant 0 : i32
    %c0_i32_1 = arith.constant 0 : i32
    return %c0_i32, %c0_i32_0 : i32, i32
  }
  func.func @transform_3(%arg0: i32) -> (i32, i32) {
    %c0_i32 = arith.constant 0 : i32
    %c0_i32_0 = arith.constant 0 : i32
    %c0_i32_1 = arith.constant 0 : i32
    return %c0_i32, %c0_i32_0 : i32, i32
  }
  func.func @transform_4(%arg0: i32) -> (i32, i32) {
    %c0_i32 = arith.constant 0 : i32
    %c0_i32_0 = arith.constant 0 : i32
    %c0_i32_1 = arith.constant 0 : i32
    return %c0_i32, %c0_i32_0 : i32, i32
  }
  func.func @transform_5(%arg0: i32) -> (i32, i32) {
    %c0_i32 = arith.constant 0 : i32
    %c0_i32_0 = arith.constant 0 : i32
    %c0_i32_1 = arith.constant 0 : i32
    return %c0_i32, %c0_i32_0 : i32, i32
  }
  func.func @transform_6(%arg0: i32) -> (i32, i32) {
    %c0_i32 = arith.constant 0 : i32
    %c0_i32_0 = arith.constant 0 : i32
    %c0_i32_1 = arith.constant 0 : i32
    return %c0_i32, %c0_i32_0 : i32, i32
  }
  func.func @transform_7(%arg0: i32) -> (i32, i32) {
    %c0_i32 = arith.constant 0 : i32
    %c0_i32_0 = arith.constant 0 : i32
    %c0_i32_1 = arith.constant 0 : i32
    return %c0_i32, %c0_i32_0 : i32, i32
  }
  func.func @transform_8(%arg0: i32) -> (i32, i32) {
    %c0_i32 = arith.constant 0 : i32
    %c0_i32_0 = arith.constant 0 : i32
    %c0_i32_1 = arith.constant 0 : i32
    return %c0_i32, %c0_i32_0 : i32, i32
  }
  func.func @transform_9(%arg0: i32) -> (i32, i32) {
    %c0_i32 = arith.constant 0 : i32
    %c0_i32_0 = arith.constant 0 : i32
    %c0_i32_1 = arith.constant 0 : i32
    return %c0_i32, %c0_i32_0 : i32, i32
  }
  func.func @transform_10(%arg0: i32) -> (i32, i32) {
    %c0_i32 = arith.constant 0 : i32
    %c0_i32_0 = arith.constant 0 : i32
    %c0_i32_1 = arith.constant 0 : i32
    return %c0_i32, %c0_i32_0 : i32, i32
  }
  func.func @transform_11(%arg0: i32) -> (i32, i32) {
    %c0_i32 = arith.constant 0 : i32
    %c0_i32_0 = arith.constant 0 : i32
    %c0_i32_1 = arith.constant 0 : i32
    return %c0_i32, %c0_i32_0 : i32, i32
  }
  func.func @transform_12(%arg0: i32) -> (i32, i32) {
    %c0_i32 = arith.constant 0 : i32
    %c0_i32_0 = arith.constant 0 : i32
    return %arg0, %c0_i32 : i32, i32
  }
}

</mosaic_0001>

<llo_original>
// kernel: tpu_custom_call.1
$region0: #{tpu_custom_call.1}
  #allocation0 [shape = 'u32[]', space=smem, size = 0x4, offset = 0x4, fixed_abs, tag = 'smem constant byte address 0x4 - core index']
  #allocation1 [shape = 'u32[144,128]{1,0:T(1,128)}', space=vmem, size = 0x12000, scoped, tag = 'internal scratch']
  %s0 = inlined_call_operand.vmem [shape: f32[16,32], index: 0, kind: input, shape index: {}]
  %s1 = inlined_call_operand.hbm [shape: f32[1,32], index: 1, kind: input, shape index: {}]
  %s2 = inlined_call_operand.vmem [shape: f32[32,64], index: 2, kind: input, shape index: {}]
  %s3 = inlined_call_operand.hbm [shape: f32[1,64], index: 3, kind: input, shape index: {}]
  %s4 = inlined_call_operand.hbm [shape: f32[8,8], index: 4, kind: input, shape index: {}]
  %s5 = inlined_call_operand.hbm [shape: f32[8,8], index: 5, kind: input, shape index: {}]
  %s6 = inlined_call_operand.hbm [shape: f32[16,16], index: 6, kind: input, shape index: {}]
  %s7 = inlined_call_operand.vmem [shape: f32[32,32], index: 7, kind: input, shape index: {}]
  %s8 = inlined_call_operand.hbm [shape: f32[1,32], index: 8, kind: input, shape index: {}]
  %s9 = inlined_call_operand.vmem [shape: f32[32,384], index: 9, kind: input, shape index: {}]
  %s10 = inlined_call_operand.vmem [shape: f32[1,2], index: 10, kind: input, shape index: {}]
  %s11 = inlined_call_operand.vmem [shape: f32[128,32], index: 11, kind: input, shape index: {}]
  %s12 = inlined_call_operand.hbm [shape: f32[16,32], index: 12, kind: output, shape index: {}]
  %s13 = sld [smem:[#allocation0]]
  $region82: #{tpu_custom_call.1} parent=0
    _
  %s15 = ssub.s32 1, %s13
  %s16 = scalar_select 0, %s15, %s13
  $region1: #{tpu_custom_call.1} parent=0
    #allocation2 [shape = 'u8[512]{0}', space=vmem, size = 0x400, scoped, tag = 'input window, operand 1, single buffered']
    #allocation3 [shape = 's32[1]{0}', space=sflag, size = 0x4, scoped, tag = 'scoped memory for tpu_custom_call.1']
    #allocation4 [shape = 's32[1]{0}', space=sflag, size = 0x4, scoped, tag = 'scoped memory for tpu_custom_call.1']
    #allocation5 [shape = 'u8[512]{0}', space=vmem, size = 0x400, scoped, tag = 'input window, operand 3, single buffered']
    #allocation6 [shape = 's32[1]{0}', space=sflag, size = 0x4, scoped, tag = 'scoped memory for tpu_custom_call.1']
    #allocation7 [shape = 'u8[4096]{0}', space=vmem, size = 0x1000, scoped, tag = 'input window, operand 4, single buffered']
    #allocation8 [shape = 'u8[4096]{0}', space=vmem, size = 0x1000, scoped, tag = 'input window, operand 5, single buffered']
    #allocation9 [shape = 's32[1]{0}', space=sflag, size = 0x4, scoped, tag = 'scoped memory for tpu_custom_call.1']
    #allocation10 [shape = 'u8[8192]{0}', space=vmem, size = 0x2000, scoped, tag = 'input window, operand 6, single buffered']
    #allocation11 [shape = 'u8[512]{0}', space=vmem, size = 0x400, scoped, tag = 'input window, operand 8, single buffered']
    #allocation12 [shape = 's32[1]{0}', space=sflag, size = 0x4, scoped, tag = 'scoped memory for tpu_custom_call.1']
    #allocation13 [shape = 'u8[8192]{0}', space=vmem, size = 0x2000, scoped, tag = 'output window, operand 0, single buffered']
    %17 = vsyncpa [#allocation3], 0
    %18 = vsyncpa [#allocation6], 0
    %19 = vsyncpa [#allocation9], 0
    %20 = vsyncpa [#allocation12], 0
    %21 = vsyncpa [#allocation4], 0
    // Predicated region
    $region2: #{tpu_custom_call.1} parent=1 // pred_check
      _
    $region3: #{tpu_custom_call.1} parent=1 // pred_check_branch
      %23 = sbr.rel (0) target = $region5
    $region4: #{tpu_custom_call.1} parent=1 // pred_region
      _
    $region5: #{tpu_custom_call.1} parent=1 // pred_fallthru
      _
    // Predicated region
    $region6: #{tpu_custom_call.1} parent=1 // pred_check
      _
    $region7: #{tpu_custom_call.1} parent=1 // pred_check_branch
      %25 = sbr.rel (0) target = $region9
    $region8: #{tpu_custom_call.1} parent=1 // pred_region
      %s27 = ssub.s32 16, 16
      %28 = vsyncadd [#allocation3], %s27
      %s30 = sshll.u32 [#allocation2], 4
      %s31 = int_to_ptr.vmem [resolvable:$true] %s30
      %33 = dma.hbm_to_vmem [thread:$0]  %s1, 16, %s31, [#allocation3]
    $region9: #{tpu_custom_call.1} parent=1 // pred_fallthru
      _
    // Predicated region
    $region10: #{tpu_custom_call.1} parent=1 // pred_check
      _
    $region11: #{tpu_custom_call.1} parent=1 // pred_check_branch
      %35 = sbr.rel (0) target = $region13
    $region12: #{tpu_custom_call.1} parent=1 // pred_region
      _
    $region13: #{tpu_custom_call.1} parent=1 // pred_fallthru
      _
    // Predicated region
    $region14: #{tpu_custom_call.1} parent=1 // pred_check
      _
    $region15: #{tpu_custom_call.1} parent=1 // pred_check_branch
      %37 = sbr.rel (0) target = $region17
    $region16: #{tpu_custom_call.1} parent=1 // pred_region
      %s39 = ssub.s32 16, 16
      %40 = vsyncadd [#allocation6], %s39
      %s42 = sshll.u32 [#allocation5], 4
      %s43 = int_to_ptr.vmem [resolvable:$true] %s42
      %45 = dma.hbm_to_vmem [thread:$0]  %s3, 16, %s43, [#allocation6]
    $region17: #{tpu_custom_call.1} parent=1 // pred_fallthru
      _
    // Predicated region
    $region18: #{tpu_custom_call.1} parent=1 // pred_check
      _
    $region19: #{tpu_custom_call.1} parent=1 // pred_check_branch
      %47 = sbr.rel (0) target = $region21
    $region20: #{tpu_custom_call.1} parent=1 // pred_region
      %s49 = ssub.s32 128, 128
      %50 = vsyncadd [#allocation6], %s49
      %s52 = sshll.u32 [#allocation7], 4
      %s53 = int_to_ptr.vmem [resolvable:$true] %s52
      %55 = dma.hbm_to_vmem [thread:$0]  %s4, 128, %s53, [#allocation6]
    $region21: #{tpu_custom_call.1} parent=1 // pred_fallthru
      _
    // Predicated region
    $region22: #{tpu_custom_call.1} parent=1 // pred_check
      _
    $region23: #{tpu_custom_call.1} parent=1 // pred_check_branch
      %57 = sbr.rel (0) target = $region25
    $region24: #{tpu_custom_call.1} parent=1 // pred_region
      %s59 = ssub.s32 128, 128
      %60 = vsyncadd [#allocation9], %s59
      %s62 = sshll.u32 [#allocation8], 4
      %s63 = int_to_ptr.vmem [resolvable:$true] %s62
      %65 = dma.hbm_to_vmem [thread:$0]  %s5, 128, %s63, [#allocation9]
    $region25: #{tpu_custom_call.1} parent=1 // pred_fallthru
      _
    // Predicated region
    $region26: #{tpu_custom_call.1} parent=1 // pred_check
      _
    $region27: #{tpu_custom_call.1} parent=1 // pred_check_branch
      %67 = sbr.rel (0) target = $region29
    $region28: #{tpu_custom_call.1} parent=1 // pred_region
      %s69 = ssub.s32 256, 256
      %70 = vsyncadd [#allocation9], %s69
      %s71 = sshll.u32 [#allocation10], 4
      %s72 = int_to_ptr.vmem [resolvable:$true] %s71
      %77 = dma.hbm_to_vmem [thread:$0]  %s6, 256, %s72, [#allocation9], 128, 128, 8
    $region29: #{tpu_custom_call.1} parent=1 // pred_fallthru
      _
    // Predicated region
    $region30: #{tpu_custom_call.1} parent=1 // pred_check
      _
    $region31: #{tpu_custom_call.1} parent=1 // pred_check_branch
      %79 = sbr.rel (0) target = $region33
    $region32: #{tpu_custom_call.1} parent=1 // pred_region
      _
    $region33: #{tpu_custom_call.1} parent=1 // pred_fallthru
      _
    // Predicated region
    $region34: #{tpu_custom_call.1} parent=1 // pred_check
      _
    $region35: #{tpu_custom_call.1} parent=1 // pred_check_branch
      %81 = sbr.rel (0) target = $region37
    $region36: #{tpu_custom_call.1} parent=1 // pred_region
      %s83 = ssub.s32 16, 16
      %84 = vsyncadd [#allocation12], %s83
      %s86 = sshll.u32 [#allocation11], 4
      %s87 = int_to_ptr.vmem [resolvable:$true] %s86
      %89 = dma.hbm_to_vmem [thread:$0]  %s8, 16, %s87, [#allocation12]
    $region37: #{tpu_custom_call.1} parent=1 // pred_fallthru
      _
    // Predicated region
    $region38: #{tpu_custom_call.1} parent=1 // pred_check
      _
    $region39: #{tpu_custom_call.1} parent=1 // pred_check_branch
      %91 = sbr.rel (0) target = $region41
    $region40: #{tpu_custom_call.1} parent=1 // pred_region
      _
    $region41: #{tpu_custom_call.1} parent=1 // pred_fallthru
      _
    // Predicated region
    $region42: #{tpu_custom_call.1} parent=1 // pred_check
      _
    $region43: #{tpu_custom_call.1} parent=1 // pred_check_branch
      %93 = sbr.rel (0) target = $region45
    $region44: #{tpu_custom_call.1} parent=1 // pred_region
      _
    $region45: #{tpu_custom_call.1} parent=1 // pred_fallthru
      _
    // Predicated region
    $region46: #{tpu_custom_call.1} parent=1 // pred_check
      _
    $region47: #{tpu_custom_call.1} parent=1 // pred_check_branch
      %95 = sbr.rel (0) target = $region49
    $region48: #{tpu_custom_call.1} parent=1 // pred_region
      _
    $region49: #{tpu_custom_call.1} parent=1 // pred_fallthru
      _
    // Predicated region
    $region50: #{tpu_custom_call.1} parent=1 // pred_check
      _
    $region51: #{tpu_custom_call.1} parent=1 // pred_check_branch
      %97 = sbr.rel (0) target = $region53
    $region52: #{tpu_custom_call.1} parent=1 // pred_region
      %98 = dma.done [#allocation3], 16
    $region53: #{tpu_custom_call.1} parent=1 // pred_fallthru
      _
    // Predicated region
    $region54: #{tpu_custom_call.1} parent=1 // pred_check
      _
    $region55: #{tpu_custom_call.1} parent=1 // pred_check_branch
      %100 = sbr.rel (0) target = $region57
    $region56: #{tpu_custom_call.1} parent=1 // pred_region
      %101 = dma.done [#allocation6], 16
    $region57: #{tpu_custom_call.1} parent=1 // pred_fallthru
      _
    // Predicated region
    $region58: #{tpu_custom_call.1} parent=1 // pred_check
      _
    $region59: #{tpu_custom_call.1} parent=1 // pred_check_branch
      %103 = sbr.rel (0) target = $region61
    $region60: #{tpu_custom_call.1} parent=1 // pred_region
      %104 = dma.done [#allocation6], 128
    $region61: #{tpu_custom_call.1} parent=1 // pred_fallthru
      _
    // Predicated region
    $region62: #{tpu_custom_call.1} parent=1 // pred_check
      _
    $region63: #{tpu_custom_call.1} parent=1 // pred_check_branch
      %106 = sbr.rel (0) target = $region65
    $region64: #{tpu_custom_call.1} parent=1 // pred_region
      %107 = dma.done [#allocation9], 128
    $region65: #{tpu_custom_call.1} parent=1 // pred_fallthru
      _
    // Predicated region
    $region66: #{tpu_custom_call.1} parent=1 // pred_check
      _
    $region67: #{tpu_custom_call.1} parent=1 // pred_check_branch
      %109 = sbr.rel (0) target = $region69
    $region68: #{tpu_custom_call.1} parent=1 // pred_region
      %110 = dma.done [#allocation9], 256
    $region69: #{tpu_custom_call.1} parent=1 // pred_fallthru
      _
    // Predicated region
    $region70: #{tpu_custom_call.1} parent=1 // pred_check
      _
    $region71: #{tpu_custom_call.1} parent=1 // pred_check_branch
      %112 = sbr.rel (0) target = $region73
    $region72: #{tpu_custom_call.1} parent=1 // pred_region
      %113 = dma.done [#allocation12], 16
    $region73: #{tpu_custom_call.1} parent=1 // pred_fallthru
      _
    %v114 = vld [vmem:[%s0] sm:$0xff]
    %v115 = vld [vmem:[%s0 + $0x8] sm:$0xff]
    %v116 = vld [vmem:[#allocation2] sm:$0x1]
    %v117 = vmul.f32 %v114, %v114
    %v118 = vmul.f32 %v115, %v115
    %vm119 = vcmask 261120
    %v120 = vsel %vm119, %v117, 0.0
    %121 = vadd.xlane.f32.xlu0 %v120
    %v122 = vpop.xlane.xlu0 %121
    %v123 = vsel %vm119, %v118, 0.0
    %124 = vadd.xlane.f32.xlu0 %v123
    %v125 = vpop.xlane.xlu0 %124
    %v126 = vrcp.pop 32.0
    %v127 = vmul.f32 %v122, %v126
    %v128 = vmul.f32 %v125, %v126
    %v129 = vadd.f32 %v127, 1e-06
    %v130 = vadd.f32 %v128, 1e-06
    %v131 = vrsqrt.pop %v129
    %v132 = vrsqrt.pop %v130
    %v133 = vmul.f32 %v114, %v131
    %v134 = vmul.f32 %v115, %v132
    %v136 = vlaneseq
    %v137 = vshrl.u32 %v136, 7
    %v138 = vsub.s32 0, %v137
    %v139 = vrot.slane %v116, %v138
    %v141 = vmul.f32 %v133, %v139
    %v142 = vmul.f32 %v134, %v139
    %v143 = vld [vmem:[%s2] sm:$0xff]
    %v144 = vld [vmem:[%s2 + $0x8] sm:$0xff]
    %v145 = vld [vmem:[%s2 + $0x10] sm:$0xff]
    %v146 = vld [vmem:[%s2 + $0x18] sm:$0xff]
    %v147 = vld [vmem:[#allocation5] sm:$0x1]
    %v149 = vlaneseq
    %v150 = vshrl.u32 %v149, 7
    %v151 = vsub.s32 0, %v150
    %v152 = vrot.slane %v147, %v151
    %v155 = vsel %vm119, %v141, 0
    %v158 = vsel %vm119, %v142, 0
    %160 = vmatprep.subr.mxu0 0.0
    %161 = vmatpush1.msra.mxu0 0.0
    %162 = vmatprep.subr.mxu0 0.0
    %163 = vmatpush1.msra.mxu0 0.0
    %164 = vmatprep.subr.mxu0 0.0
    %165 = vmatpush1.msra.mxu0 0.0
    %166 = vmatprep.subr.mxu0 0.0
    %167 = vmatpush1.msra.mxu0 0.0
    %168 = vmatprep.subr.mxu0 0.0
    %169 = vmatpush1.msra.mxu0 0.0
    %170 = vmatprep.subr.mxu0 0.0
    %171 = vmatpush1.msra.mxu0 0.0
    %172 = vmatprep.subr.mxu0 0.0
    %173 = vmatpush1.msra.mxu0 0.0
    %174 = vmatprep.subr.mxu0 0.0
    %175 = vmatpush1.msra.mxu0 0.0
    %176 = vmatprep.subr.mxu0 0.0
    %177 = vmatpush1.msra.mxu0 0.0
    %178 = vmatprep.subr.mxu0 0.0
    %179 = vmatpush1.msra.mxu0 0.0
    %180 = vmatprep.subr.mxu0 0.0
    %181 = vmatpush1.msra.mxu0 0.0
    %182 = vmatprep.subr.mxu0 0.0
    %183 = vmatpush1.msra.mxu0 0.0
    %184 = vmatprep.subr.mxu0 0.0
    %185 = vmatpush1.msra.mxu0 %v146
    %186 = vmatprep.subr.mxu0 0.0
    %187 = vmatpush1.msra.mxu0 %v145
    %188 = vmatprep.subr.mxu0 0.0
    %189 = vmatpush1.msra.mxu0 %v144
    %190 = vmatprep.subr.mxu0 0.0
    %191 = vmatpush1.msra.mxu0 %v143
    %192 = vmatprep.subr.mxu0 0.0
    %193 = vmatpush2.msra.mxu0 0.0
    %194 = vmatprep.subr.mxu0 0.0
    %195 = vmatpush2.msra.mxu0 0.0
    %196 = vmatprep.subr.mxu0 0.0
    %197 = vmatpush2.msra.mxu0 0.0
    %198 = vmatprep.subr.mxu0 0.0
    %199 = vmatpush2.msra.mxu0 0.0
    %200 = vmatprep.subr.mxu0 0.0
    %201 = vmatpush2.msra.mxu0 0.0
    %202 = vmatprep.subr.mxu0 0.0
    %203 = vmatpush2.msra.mxu0 0.0
    %204 = vmatprep.subr.mxu0 0.0
    %205 = vmatpush2.msra.mxu0 0.0
    %206 = vmatprep.subr.mxu0 0.0
    %207 = vmatpush2.msra.mxu0 0.0
    %208 = vmatprep.subr.mxu0 0.0
    %209 = vmatpush2.msra.mxu0 0.0
    %210 = vmatprep.subr.mxu0 0.0
    %211 = vmatpush2.msra.mxu0 0.0
    %212 = vmatprep.subr.mxu0 0.0
    %213 = vmatpush2.msra.mxu0 0.0
    %214 = vmatprep.subr.mxu0 0.0
    %215 = vmatpush2.msra.mxu0 0.0
    %216 = vmatprep.subr.mxu0 0.0
    %217 = vmatpush2.msra.mxu0 0.0
    %218 = vmatprep.subr.mxu0 0.0
    %219 = vmatpush2.msra.mxu0 0.0
    %220 = vmatprep.subr.mxu0 0.0
    %221 = vmatpush2.msra.mxu0 0.0
    %222 = vmatprep.subr.mxu0 0.0
    %223 = vmatpush2.msra.mxu0 0.0
    %224 = vmatprep.mubr.f32.mxu0 0.0
    %225 = vmatmul.mubr.f32.gmra.mxu0 %v155
    %v226 = vpop.f32.mrf.mxu0
    %v227 = vadd.f32 %v152, %v226
    %v228 = vpop.f32.mrf.mxu0
    %229 = vmatprep.mubr.f32.mxu0 0.0
    %230 = vmatmul.mubr.f32.gmra.mxu0 %v158
    %v231 = vpop.f32.mrf.mxu0
    %v232 = vadd.f32 %v152, %v231
    %v233 = vpop.f32.mrf.mxu0
    %234 = vdwg.mxu0
    %v235 = vld [vmem:[#allocation7] sm:$0xff]
    %v236 = vld [vmem:[#allocation8] sm:$0xff]
    %239 = vrot.lane.b32.xlu0 %v227, 120
    %v240 = vpop.permute.xlu0 %239
    %241 = vrot.lane.b32.xlu0 %v232, 120
    %v242 = vpop.permute.xlu0 %241
    %245 = vrot.lane.b32.xlu0 %v227, 112
    %v246 = vpop.permute.xlu0 %245
    %247 = vrot.lane.b32.xlu0 %v232, 112
    %v248 = vpop.permute.xlu0 %247
    %251 = vrot.lane.b32.xlu0 %v227, 104
    %v252 = vpop.permute.xlu0 %251
    %253 = vrot.lane.b32.xlu0 %v232, 104
    %v254 = vpop.permute.xlu0 %253
    %257 = vrot.lane.b32.xlu0 %v227, 124
    %v258 = vpop.permute.xlu0 %257
    %259 = vrot.lane.b32.xlu0 %v232, 124
    %v260 = vpop.permute.xlu0 %259
    %261 = vrot.lane.b32.xlu0 %v240, 124
    %v262 = vpop.permute.xlu0 %261
    %263 = vrot.lane.b32.xlu0 %v242, 124
    %v264 = vpop.permute.xlu0 %263
    %265 = vrot.lane.b32.xlu0 %v246, 124
    %v266 = vpop.permute.xlu0 %265
    %267 = vrot.lane.b32.xlu0 %v248, 124
    %v268 = vpop.permute.xlu0 %267
    %269 = vrot.lane.b32.xlu0 %v252, 124
    %v270 = vpop.permute.xlu0 %269
    %271 = vrot.lane.b32.xlu0 %v254, 124
    %v272 = vpop.permute.xlu0 %271
    %281 = vrot.lane.b32.xlu0 %v227, 4
    %v282 = vpop.permute.xlu0 %281
    %283 = vrot.lane.b32.xlu0 %v232, 4
    %v284 = vpop.permute.xlu0 %283
    %285 = vrot.lane.b32.xlu0 %v240, 4
    %v286 = vpop.permute.xlu0 %285
    %287 = vrot.lane.b32.xlu0 %v242, 4
    %v288 = vpop.permute.xlu0 %287
    %289 = vrot.lane.b32.xlu0 %v246, 4
    %v290 = vpop.permute.xlu0 %289
    %291 = vrot.lane.b32.xlu0 %v248, 4
    %v292 = vpop.permute.xlu0 %291
    %293 = vrot.lane.b32.xlu0 %v252, 4
    %v294 = vpop.permute.xlu0 %293
    %295 = vrot.lane.b32.xlu0 %v254, 4
    %v296 = vpop.permute.xlu0 %295
    %vm305 = vcmask 31744
    %v306 = vsel %vm305, %v258, %v282
    %v307 = vsel %vm305, %v260, %v284
    %v308 = vsel %vm305, %v262, %v286
    %v309 = vsel %vm305, %v264, %v288
    %v310 = vsel %vm305, %v266, %v290
    %v311 = vsel %vm305, %v268, %v292
    %v312 = vsel %vm305, %v270, %v294
    %v313 = vsel %vm305, %v272, %v296
    %v314 = vmul.f32 %v227, %v235
    %v315 = vmul.f32 %v232, %v235
    %v316 = vmul.f32 %v240, %v235
    %v317 = vmul.f32 %v242, %v235
    %v318 = vmul.f32 %v246, %v235
    %v319 = vmul.f32 %v248, %v235
    %v320 = vmul.f32 %v252, %v235
    %v321 = vmul.f32 %v254, %v235
    %v322 = vmul.f32 %v306, %v236
    %v323 = vmul.f32 %v307, %v236
    %v324 = vmul.f32 %v308, %v236
    %v325 = vmul.f32 %v309, %v236
    %v326 = vmul.f32 %v310, %v236
    %v327 = vmul.f32 %v311, %v236
    %v328 = vmul.f32 %v312, %v236
    %v329 = vmul.f32 %v313, %v236
    %v330 = vadd.f32 %v314, %v322
    %v331 = vadd.f32 %v315, %v323
    %v332 = vadd.f32 %v316, %v324
    %v333 = vadd.f32 %v317, %v325
    %v334 = vadd.f32 %v318, %v326
    %v335 = vadd.f32 %v319, %v327
    %v336 = vadd.f32 %v320, %v328
    %v337 = vadd.f32 %v321, %v329
    %v338 = vmul.f32 %v330, 0.35355338
    %v339 = vmul.f32 %v331, 0.35355338
    %v340 = vmul.f32 %v332, 0.35355338
    %v341 = vmul.f32 %v333, 0.35355338
    %v342 = vmul.f32 %v334, 0.35355338
    %v343 = vmul.f32 %v335, 0.35355338
    %v344 = vmul.f32 %v336, 0.35355338
    %v345 = vmul.f32 %v337, 0.35355338
    %346 = vrot.lane.b32.xlu0 %v227, 92
    %v347 = vpop.permute.xlu0 %346
    %348 = vrot.lane.b32.xlu0 %v232, 92
    %v349 = vpop.permute.xlu0 %348
    %352 = vrot.lane.b32.xlu0 %v227, 100
    %v353 = vpop.permute.xlu0 %352
    %354 = vrot.lane.b32.xlu0 %v232, 100
    %v355 = vpop.permute.xlu0 %354
    %v358 = vsel %vm305, %v347, %v353
    %v359 = vsel %vm305, %v349, %v355
    %361 = vrot.lane.b32.xlu0 %v235, 32
    %v362 = vpop.permute.xlu0 %361
    %v364 = vmul.f32 %v227, %v362
    %v365 = vmul.f32 %v232, %v362
    %v366 = vmul.f32 %v358, %v236
    %v367 = vmul.f32 %v359, %v236
    %370 = vrot.lane.b32.xlu0 %v366, 32
    %v371 = vpop.permute.xlu0 %370
    %372 = vrot.lane.b32.xlu0 %v367, 32
    %v373 = vpop.permute.xlu0 %372
    %v376 = vadd.f32 %v364, %v371
    %v377 = vadd.f32 %v365, %v373
    %378 = vrot.lane.b32.xlu0 %v227, 84
    %v379 = vpop.permute.xlu0 %378
    %380 = vrot.lane.b32.xlu0 %v232, 84
    %v381 = vpop.permute.xlu0 %380
    %v384 = vsel %vm305, %v379, %v347
    %v385 = vsel %vm305, %v381, %v349
    %386 = vrot.lane.b32.xlu0 %v235, 40
    %v387 = vpop.permute.xlu0 %386
    %v389 = vmul.f32 %v227, %v387
    %v390 = vmul.f32 %v232, %v387
    %v391 = vmul.f32 %v384, %v236
    %v392 = vmul.f32 %v385, %v236
    %395 = vrot.lane.b32.xlu0 %v391, 40
    %v396 = vpop.permute.xlu0 %395
    %397 = vrot.lane.b32.xlu0 %v392, 40
    %v398 = vpop.permute.xlu0 %397
    %v401 = vadd.f32 %v389, %v396
    %v402 = vadd.f32 %v390, %v398
    %405 = vrot.lane.b32.xlu0 %v401, 120
    %v406 = vpop.permute.xlu0 %405
    %407 = vrot.lane.b32.xlu0 %v402, 120
    %v408 = vpop.permute.xlu0 %407
    %v409 = vld [vmem:[#allocation10] sm:$0xff]
    %v410 = vld [vmem:[#allocation10 + $0x8] sm:$0xff]
    %413 = vrot.lane.b32.xlu0 %v376, 96
    %v414 = vpop.permute.xlu0 %413
    %415 = vrot.lane.b32.xlu0 %v377, 96
    %v416 = vpop.permute.xlu0 %415
    %vm417 = vcmask 64512
    %v419 = vsel %vm417, %v338, 0
    %v422 = vsel %vm417, %v339, 0
    %v424 = vsel %vm417, %v414, 0
    %v426 = vsel %vm417, %v416, 0
    %428 = vmatprep.subr.mxu0 0.0
    %429 = vmatpush1.xpose.msra.mxu0 0.0
    %430 = vmatprep.subr.mxu0 0.0
    %431 = vmatpush1.xpose.msra.mxu0 0.0
    %432 = vmatprep.subr.mxu0 0.0
    %433 = vmatpush1.xpose.msra.mxu0 0.0
    %434 = vmatprep.subr.mxu0 0.0
    %435 = vmatpush1.xpose.msra.mxu0 0.0
    %436 = vmatprep.subr.mxu0 0.0
    %437 = vmatpush1.xpose.msra.mxu0 0.0
    %438 = vmatprep.subr.mxu0 0.0
    %439 = vmatpush1.xpose.msra.mxu0 0.0
    %440 = vmatprep.subr.mxu0 0.0
    %441 = vmatpush1.xpose.msra.mxu0 0.0
    %442 = vmatprep.subr.mxu0 0.0
    %443 = vmatpush1.xpose.msra.mxu0 0.0
    %444 = vmatprep.subr.mxu0 0.0
    %445 = vmatpush1.xpose.msra.mxu0 0.0
    %446 = vmatprep.subr.mxu0 0.0
    %447 = vmatpush1.xpose.msra.mxu0 0.0
    %448 = vmatprep.subr.mxu0 0.0
    %449 = vmatpush1.xpose.msra.mxu0 0.0
    %450 = vmatprep.subr.mxu0 0.0
    %451 = vmatpush1.xpose.msra.mxu0 0.0
    %452 = vmatprep.subr.mxu0 0.0
    %453 = vmatpush1.xpose.msra.mxu0 0.0
    %454 = vmatprep.subr.mxu0 0.0
    %455 = vmatpush1.xpose.msra.mxu0 0.0
    %456 = vmatprep.subr.mxu0 0.0
    %457 = vmatpush1.xpose.msra.mxu0 %v426
    %458 = vmatprep.subr.mxu0 0.0
    %459 = vmatpush1.xpose.msra.mxu0 %v424
    %460 = vmatprep.subr.mxu0 0.0
    %461 = vmatpush2.xpose.msra.mxu0 0.0
    %462 = vmatprep.subr.mxu0 0.0
    %463 = vmatpush2.xpose.msra.mxu0 0.0
    %464 = vmatprep.subr.mxu0 0.0
    %465 = vmatpush2.xpose.msra.mxu0 0.0
    %466 = vmatprep.subr.mxu0 0.0
    %467 = vmatpush2.xpose.msra.mxu0 0.0
    %468 = vmatprep.subr.mxu0 0.0
    %469 = vmatpush2.xpose.msra.mxu0 0.0
    %470 = vmatprep.subr.mxu0 0.0
    %471 = vmatpush2.xpose.msra.mxu0 0.0
    %472 = vmatprep.subr.mxu0 0.0
    %473 = vmatpush2.xpose.msra.mxu0 0.0
    %474 = vmatprep.subr.mxu0 0.0
    %475 = vmatpush2.xpose.msra.mxu0 0.0
    %476 = vmatprep.subr.mxu0 0.0
    %477 = vmatpush2.xpose.msra.mxu0 0.0
    %478 = vmatprep.subr.mxu0 0.0
    %479 = vmatpush2.xpose.msra.mxu0 0.0
    %480 = vmatprep.subr.mxu0 0.0
    %481 = vmatpush2.xpose.msra.mxu0 0.0
    %482 = vmatprep.subr.mxu0 0.0
    %483 = vmatpush2.xpose.msra.mxu0 0.0
    %484 = vmatprep.subr.mxu0 0.0
    %485 = vmatpush2.xpose.msra.mxu0 0.0
    %486 = vmatprep.subr.mxu0 0.0
    %487 = vmatpush2.xpose.msra.mxu0 0.0
    %488 = vmatprep.subr.mxu0 0.0
    %489 = vmatpush2.xpose.msra.mxu0 0.0
    %490 = vmatprep.subr.mxu0 0.0
    %491 = vmatpush2.xpose.msra.mxu0 0.0
    %492 = vmatprep.mubr.f32.mxu0 0.0
    %493 = vmatmul.mubr.f32.gmra.mxu0 %v419
    %v494 = vpop.f32.mrf.mxu0
    %v495 = vadd.f32 %v409, %v494
    %v496 = vpop.f32.mrf.mxu0
    %497 = vmatprep.mubr.f32.mxu0 0.0
    %498 = vmatmul.mubr.f32.gmra.mxu0 %v422
    %v499 = vpop.f32.mrf.mxu0
    %v500 = vadd.f32 %v410, %v499
    %v501 = vpop.f32.mrf.mxu0
    %502 = vdwg.mxu0
    %v504 = vsel %vm417, %v340, 0
    %v507 = vsel %vm417, %v341, 0
    %509 = vmatprep.subr.mxu0 0.0
    %510 = vmatpush1.xpose.msra.mxu0 0.0
    %511 = vmatprep.subr.mxu0 0.0
    %512 = vmatpush1.xpose.msra.mxu0 0.0
    %513 = vmatprep.subr.mxu0 0.0
    %514 = vmatpush1.xpose.msra.mxu0 0.0
    %515 = vmatprep.subr.mxu0 0.0
    %516 = vmatpush1.xpose.msra.mxu0 0.0
    %517 = vmatprep.subr.mxu0 0.0
    %518 = vmatpush1.xpose.msra.mxu0 0.0
    %519 = vmatprep.subr.mxu0 0.0
    %520 = vmatpush1.xpose.msra.mxu0 0.0
    %521 = vmatprep.subr.mxu0 0.0
    %522 = vmatpush1.xpose.msra.mxu0 0.0
    %523 = vmatprep.subr.mxu0 0.0
    %524 = vmatpush1.xpose.msra.mxu0 0.0
    %525 = vmatprep.subr.mxu0 0.0
    %526 = vmatpush1.xpose.msra.mxu0 0.0
    %527 = vmatprep.subr.mxu0 0.0
    %528 = vmatpush1.xpose.msra.mxu0 0.0
    %529 = vmatprep.subr.mxu0 0.0
    %530 = vmatpush1.xpose.msra.mxu0 0.0
    %531 = vmatprep.subr.mxu0 0.0
    %532 = vmatpush1.xpose.msra.mxu0 0.0
    %533 = vmatprep.subr.mxu0 0.0
    %534 = vmatpush1.xpose.msra.mxu0 0.0
    %535 = vmatprep.subr.mxu0 0.0
    %536 = vmatpush1.xpose.msra.mxu0 0.0
    %537 = vmatprep.subr.mxu0 0.0
    %538 = vmatpush1.xpose.msra.mxu0 %v426
    %539 = vmatprep.subr.mxu0 0.0
    %540 = vmatpush1.xpose.msra.mxu0 %v424
    %541 = vmatprep.subr.mxu0 0.0
    %542 = vmatpush2.xpose.msra.mxu0 0.0
    %543 = vmatprep.subr.mxu0 0.0
    %544 = vmatpush2.xpose.msra.mxu0 0.0
    %545 = vmatprep.subr.mxu0 0.0
    %546 = vmatpush2.xpose.msra.mxu0 0.0
    %547 = vmatprep.subr.mxu0 0.0
    %548 = vmatpush2.xpose.msra.mxu0 0.0
    %549 = vmatprep.subr.mxu0 0.0
    %550 = vmatpush2.xpose.msra.mxu0 0.0
    %551 = vmatprep.subr.mxu0 0.0
    %552 = vmatpush2.xpose.msra.mxu0 0.0
    %553 = vmatprep.subr.mxu0 0.0
    %554 = vmatpush2.xpose.msra.mxu0 0.0
    %555 = vmatprep.subr.mxu0 0.0
    %556 = vmatpush2.xpose.msra.mxu0 0.0
    %557 = vmatprep.subr.mxu0 0.0
    %558 = vmatpush2.xpose.msra.mxu0 0.0
    %559 = vmatprep.subr.mxu0 0.0
    %560 = vmatpush2.xpose.msra.mxu0 0.0
    %561 = vmatprep.subr.mxu0 0.0
    %562 = vmatpush2.xpose.msra.mxu0 0.0
    %563 = vmatprep.subr.mxu0 0.0
    %564 = vmatpush2.xpose.msra.mxu0 0.0
    %565 = vmatprep.subr.mxu0 0.0
    %566 = vmatpush2.xpose.msra.mxu0 0.0
    %567 = vmatprep.subr.mxu0 0.0
    %568 = vmatpush2.xpose.msra.mxu0 0.0
    %569 = vmatprep.subr.mxu0 0.0
    %570 = vmatpush2.xpose.msra.mxu0 0.0
    %571 = vmatprep.subr.mxu0 0.0
    %572 = vmatpush2.xpose.msra.mxu0 0.0
    %573 = vmatprep.mubr.f32.mxu0 0.0
    %574 = vmatmul.mubr.f32.gmra.mxu0 %v504
    %v575 = vpop.f32.mrf.mxu0
    %v576 = vadd.f32 %v409, %v575
    %v577 = vpop.f32.mrf.mxu0
    %578 = vmatprep.mubr.f32.mxu0 0.0
    %579 = vmatmul.mubr.f32.gmra.mxu0 %v507
    %v580 = vpop.f32.mrf.mxu0
    %v581 = vadd.f32 %v410, %v580
    %v582 = vpop.f32.mrf.mxu0
    %583 = vdwg.mxu0
    %584 = vrot.lane.b32.xlu0 %v406, 96
    %v585 = vpop.permute.xlu0 %584
    %586 = vrot.lane.b32.xlu0 %v408, 96
    %v587 = vpop.permute.xlu0 %586
    %v589 = vsel %vm417, %v342, 0
    %v592 = vsel %vm417, %v343, 0
    %v594 = vsel %vm417, %v585, 0
    %v596 = vsel %vm417, %v587, 0
    %598 = vmatprep.subr.mxu0 0.0
    %599 = vmatpush1.xpose.msra.mxu0 0.0
    %600 = vmatprep.subr.mxu0 0.0
    %601 = vmatpush1.xpose.msra.mxu0 0.0
    %602 = vmatprep.subr.mxu0 0.0
    %603 = vmatpush1.xpose.msra.mxu0 0.0
    %604 = vmatprep.subr.mxu0 0.0
    %605 = vmatpush1.xpose.msra.mxu0 0.0
    %606 = vmatprep.subr.mxu0 0.0
    %607 = vmatpush1.xpose.msra.mxu0 0.0
    %608 = vmatprep.subr.mxu0 0.0
    %609 = vmatpush1.xpose.msra.mxu0 0.0
    %610 = vmatprep.subr.mxu0 0.0
    %611 = vmatpush1.xpose.msra.mxu0 0.0
    %612 = vmatprep.subr.mxu0 0.0
    %613 = vmatpush1.xpose.msra.mxu0 0.0
    %614 = vmatprep.subr.mxu0 0.0
    %615 = vmatpush1.xpose.msra.mxu0 0.0
    %616 = vmatprep.subr.mxu0 0.0
    %617 = vmatpush1.xpose.msra.mxu0 0.0
    %618 = vmatprep.subr.mxu0 0.0
    %619 = vmatpush1.xpose.msra.mxu0 0.0
    %620 = vmatprep.subr.mxu0 0.0
    %621 = vmatpush1.xpose.msra.mxu0 0.0
    %622 = vmatprep.subr.mxu0 0.0
    %623 = vmatpush1.xpose.msra.mxu0 0.0
    %624 = vmatprep.subr.mxu0 0.0
    %625 = vmatpush1.xpose.msra.mxu0 0.0
    %626 = vmatprep.subr.mxu0 0.0
    %627 = vmatpush1.xpose.msra.mxu0 %v596
    %628 = vmatprep.subr.mxu0 0.0
    %629 = vmatpush1.xpose.msra.mxu0 %v594
    %630 = vmatprep.subr.mxu0 0.0
    %631 = vmatpush2.xpose.msra.mxu0 0.0
    %632 = vmatprep.subr.mxu0 0.0
    %633 = vmatpush2.xpose.msra.mxu0 0.0
    %634 = vmatprep.subr.mxu0 0.0
    %635 = vmatpush2.xpose.msra.mxu0 0.0
    %636 = vmatprep.subr.mxu0 0.0
    %637 = vmatpush2.xpose.msra.mxu0 0.0
    %638 = vmatprep.subr.mxu0 0.0
    %639 = vmatpush2.xpose.msra.mxu0 0.0
    %640 = vmatprep.subr.mxu0 0.0
    %641 = vmatpush2.xpose.msra.mxu0 0.0
    %642 = vmatprep.subr.mxu0 0.0
    %643 = vmatpush2.xpose.msra.mxu0 0.0
    %644 = vmatprep.subr.mxu0 0.0
    %645 = vmatpush2.xpose.msra.mxu0 0.0
    %646 = vmatprep.subr.mxu0 0.0
    %647 = vmatpush2.xpose.msra.mxu0 0.0
    %648 = vmatprep.subr.mxu0 0.0
    %649 = vmatpush2.xpose.msra.mxu0 0.0
    %650 = vmatprep.subr.mxu0 0.0
    %651 = vmatpush2.xpose.msra.mxu0 0.0
    %652 = vmatprep.subr.mxu0 0.0
    %653 = vmatpush2.xpose.msra.mxu0 0.0
    %654 = vmatprep.subr.mxu0 0.0
    %655 = vmatpush2.xpose.msra.mxu0 0.0
    %656 = vmatprep.subr.mxu0 0.0
    %657 = vmatpush2.xpose.msra.mxu0 0.0
    %658 = vmatprep.subr.mxu0 0.0
    %659 = vmatpush2.xpose.msra.mxu0 0.0
    %660 = vmatprep.subr.mxu0 0.0
    %661 = vmatpush2.xpose.msra.mxu0 0.0
    %662 = vmatprep.mubr.f32.mxu0 0.0
    %663 = vmatmul.mubr.f32.gmra.mxu0 %v589
    %v664 = vpop.f32.mrf.mxu0
    %v665 = vadd.f32 %v409, %v664
    %v666 = vpop.f32.mrf.mxu0
    %667 = vmatprep.mubr.f32.mxu0 0.0
    %668 = vmatmul.mubr.f32.gmra.mxu0 %v592
    %v669 = vpop.f32.mrf.mxu0
    %v670 = vadd.f32 %v410, %v669
    %v671 = vpop.f32.mrf.mxu0
    %672 = vdwg.mxu0
    %v674 = vsel %vm417, %v344, 0
    %v677 = vsel %vm417, %v345, 0
    %679 = vmatprep.subr.mxu0 0.0
    %680 = vmatpush1.xpose.msra.mxu0 0.0
    %681 = vmatprep.subr.mxu0 0.0
    %682 = vmatpush1.xpose.msra.mxu0 0.0
    %683 = vmatprep.subr.mxu0 0.0
    %684 = vmatpush1.xpose.msra.mxu0 0.0
    %685 = vmatprep.subr.mxu0 0.0
    %686 = vmatpush1.xpose.msra.mxu0 0.0
    %687 = vmatprep.subr.mxu0 0.0
    %688 = vmatpush1.xpose.msra.mxu0 0.0
    %689 = vmatprep.subr.mxu0 0.0
    %690 = vmatpush1.xpose.msra.mxu0 0.0
    %691 = vmatprep.subr.mxu0 0.0
    %692 = vmatpush1.xpose.msra.mxu0 0.0
    %693 = vmatprep.subr.mxu0 0.0
    %694 = vmatpush1.xpose.msra.mxu0 0.0
    %695 = vmatprep.subr.mxu0 0.0
    %696 = vmatpush1.xpose.msra.mxu0 0.0
    %697 = vmatprep.subr.mxu0 0.0
    %698 = vmatpush1.xpose.msra.mxu0 0.0
    %699 = vmatprep.subr.mxu0 0.0
    %700 = vmatpush1.xpose.msra.mxu0 0.0
    %701 = vmatprep.subr.mxu0 0.0
    %702 = vmatpush1.xpose.msra.mxu0 0.0
    %703 = vmatprep.subr.mxu0 0.0
    %704 = vmatpush1.xpose.msra.mxu0 0.0
    %705 = vmatprep.subr.mxu0 0.0
    %706 = vmatpush1.xpose.msra.mxu0 0.0
    %707 = vmatprep.subr.mxu0 0.0
    %708 = vmatpush1.xpose.msra.mxu0 %v596
    %709 = vmatprep.subr.mxu0 0.0
    %710 = vmatpush1.xpose.msra.mxu0 %v594
    %711 = vmatprep.subr.mxu0 0.0
    %712 = vmatpush2.xpose.msra.mxu0 0.0
    %713 = vmatprep.subr.mxu0 0.0
    %714 = vmatpush2.xpose.msra.mxu0 0.0
    %715 = vmatprep.subr.mxu0 0.0
    %716 = vmatpush2.xpose.msra.mxu0 0.0
    %717 = vmatprep.subr.mxu0 0.0
    %718 = vmatpush2.xpose.msra.mxu0 0.0
    %719 = vmatprep.subr.mxu0 0.0
    %720 = vmatpush2.xpose.msra.mxu0 0.0
    %721 = vmatprep.subr.mxu0 0.0
    %722 = vmatpush2.xpose.msra.mxu0 0.0
    %723 = vmatprep.subr.mxu0 0.0
    %724 = vmatpush2.xpose.msra.mxu0 0.0
    %725 = vmatprep.subr.mxu0 0.0
    %726 = vmatpush2.xpose.msra.mxu0 0.0
    %727 = vmatprep.subr.mxu0 0.0
    %728 = vmatpush2.xpose.msra.mxu0 0.0
    %729 = vmatprep.subr.mxu0 0.0
    %730 = vmatpush2.xpose.msra.mxu0 0.0
    %731 = vmatprep.subr.mxu0 0.0
    %732 = vmatpush2.xpose.msra.mxu0 0.0
    %733 = vmatprep.subr.mxu0 0.0
    %734 = vmatpush2.xpose.msra.mxu0 0.0
    %735 = vmatprep.subr.mxu0 0.0
    %736 = vmatpush2.xpose.msra.mxu0 0.0
    %737 = vmatprep.subr.mxu0 0.0
    %738 = vmatpush2.xpose.msra.mxu0 0.0
    %739 = vmatprep.subr.mxu0 0.0
    %740 = vmatpush2.xpose.msra.mxu0 0.0
    %741 = vmatprep.subr.mxu0 0.0
    %742 = vmatpush2.xpose.msra.mxu0 0.0
    %743 = vmatprep.mubr.f32.mxu0 0.0
    %744 = vmatmul.mubr.f32.gmra.mxu0 %v674
    %v745 = vpop.f32.mrf.mxu0
    %v746 = vadd.f32 %v409, %v745
    %v747 = vpop.f32.mrf.mxu0
    %748 = vmatprep.mubr.f32.mxu0 0.0
    %749 = vmatmul.mubr.f32.gmra.mxu0 %v677
    %v750 = vpop.f32.mrf.mxu0
    %v751 = vadd.f32 %v410, %v750
    %v752 = vpop.f32.mrf.mxu0
    %753 = vdwg.mxu0
    %vm754 = vcmask 130048
    %v755 = vsel %vm754, %v495, -inf
    %756 = vmax.xlane.f32.xlu0 %v755
    %v757 = vpop.xlane.xlu0 %756
    %v758 = vsel %vm754, %v500, -inf
    %759 = vmax.xlane.f32.xlu0 %v758
    %v760 = vpop.xlane.xlu0 %759
    %v761 = vsel %vm754, %v576, -inf
    %762 = vmax.xlane.f32.xlu0 %v761
    %v763 = vpop.xlane.xlu0 %762
    %v764 = vsel %vm754, %v581, -inf
    %765 = vmax.xlane.f32.xlu0 %v764
    %v766 = vpop.xlane.xlu0 %765
    %v767 = vsel %vm754, %v665, -inf
    %768 = vmax.xlane.f32.xlu0 %v767
    %v769 = vpop.xlane.xlu0 %768
    %v770 = vsel %vm754, %v670, -inf
    %771 = vmax.xlane.f32.xlu0 %v770
    %v772 = vpop.xlane.xlu0 %771
    %v773 = vsel %vm754, %v746, -inf
    %774 = vmax.xlane.f32.xlu0 %v773
    %v775 = vpop.xlane.xlu0 %774
    %v776 = vsel %vm754, %v751, -inf
    %777 = vmax.xlane.f32.xlu0 %v776
    %v778 = vpop.xlane.xlu0 %777
    %v779 = vsub.f32 %v495, %v757
    %v780 = vsub.f32 %v500, %v760
    %v781 = vsub.f32 %v576, %v763
    %v782 = vsub.f32 %v581, %v766
    %v783 = vsub.f32 %v665, %v769
    %v784 = vsub.f32 %v670, %v772
    %v785 = vsub.f32 %v746, %v775
    %v786 = vsub.f32 %v751, %v778
    %v787 = vmul.f32 %v779, 1.442695
    %v788 = vpow.pop %v787
    %v789 = vmul.f32 %v780, 1.442695
    %v790 = vpow.pop %v789
    %v791 = vmul.f32 %v781, 1.442695
    %v792 = vpow.pop %v791
    %v793 = vmul.f32 %v782, 1.442695
    %v794 = vpow.pop %v793
    %v795 = vmul.f32 %v783, 1.442695
    %v796 = vpow.pop %v795
    %v797 = vmul.f32 %v784, 1.442695
    %v798 = vpow.pop %v797
    %v799 = vmul.f32 %v785, 1.442695
    %v800 = vpow.pop %v799
    %v801 = vmul.f32 %v786, 1.442695
    %v802 = vpow.pop %v801
    %v803 = vsel %vm754, %v788, 0.0
    %804 = vadd.xlane.f32.xlu0 %v803
    %v805 = vpop.xlane.xlu0 %804
    %v806 = vsel %vm754, %v790, 0.0
    %807 = vadd.xlane.f32.xlu0 %v806
    %v808 = vpop.xlane.xlu0 %807
    %v809 = vsel %vm754, %v792, 0.0
    %810 = vadd.xlane.f32.xlu0 %v809
    %v811 = vpop.xlane.xlu0 %810
    %v812 = vsel %vm754, %v794, 0.0
    %813 = vadd.xlane.f32.xlu0 %v812
    %v814 = vpop.xlane.xlu0 %813
    %v815 = vsel %vm754, %v796, 0.0
    %816 = vadd.xlane.f32.xlu0 %v815
    %v817 = vpop.xlane.xlu0 %816
    %v818 = vsel %vm754, %v798, 0.0
    %819 = vadd.xlane.f32.xlu0 %v818
    %v820 = vpop.xlane.xlu0 %819
    %v821 = vsel %vm754, %v800, 0.0
    %822 = vadd.xlane.f32.xlu0 %v821
    %v823 = vpop.xlane.xlu0 %822
    %v824 = vsel %vm754, %v802, 0.0
    %825 = vadd.xlane.f32.xlu0 %v824
    %v826 = vpop.xlane.xlu0 %825
    %v827 = vrcp.pop %v805
    %v828 = vrcp.pop %v808
    %v829 = vrcp.pop %v811
    %v830 = vrcp.pop %v814
    %v831 = vrcp.pop %v817
    %v832 = vrcp.pop %v820
    %v833 = vrcp.pop %v823
    %v834 = vrcp.pop %v826
    %v835 = vmul.f32 %v788, %v827
    %v836 = vmul.f32 %v790, %v828
    %v837 = vmul.f32 %v792, %v829
    %v838 = vmul.f32 %v794, %v830
    %v839 = vmul.f32 %v796, %v831
    %v840 = vmul.f32 %v798, %v832
    %v841 = vmul.f32 %v800, %v833
    %v842 = vmul.f32 %v802, %v834
    %843 = vrot.lane.b32.xlu0 %v227, 80
    %v844 = vpop.permute.xlu0 %843
    %845 = vrot.lane.b32.xlu0 %v232, 80
    %v846 = vpop.permute.xlu0 %845
    %v850 = vsel %vm754, %v835, 0
    %v853 = vsel %vm754, %v836, 0
    %855 = vmatprep.subr.mxu0 0.0
    %856 = vmatpush1.msra.mxu0 0.0
    %857 = vmatprep.subr.mxu0 0.0
    %858 = vmatpush1.msra.mxu0 0.0
    %859 = vmatprep.subr.mxu0 0.0
    %860 = vmatpush1.msra.mxu0 0.0
    %861 = vmatprep.subr.mxu0 0.0
    %862 = vmatpush1.msra.mxu0 0.0
    %863 = vmatprep.subr.mxu0 0.0
    %864 = vmatpush1.msra.mxu0 0.0
    %865 = vmatprep.subr.mxu0 0.0
    %866 = vmatpush1.msra.mxu0 0.0
    %867 = vmatprep.subr.mxu0 0.0
    %868 = vmatpush1.msra.mxu0 0.0
    %869 = vmatprep.subr.mxu0 0.0
    %870 = vmatpush1.msra.mxu0 0.0
    %871 = vmatprep.subr.mxu0 0.0
    %872 = vmatpush1.msra.mxu0 0.0
    %873 = vmatprep.subr.mxu0 0.0
    %874 = vmatpush1.msra.mxu0 0.0
    %875 = vmatprep.subr.mxu0 0.0
    %876 = vmatpush1.msra.mxu0 0.0
    %877 = vmatprep.subr.mxu0 0.0
    %878 = vmatpush1.msra.mxu0 0.0
    %879 = vmatprep.subr.mxu0 0.0
    %880 = vmatpush1.msra.mxu0 0.0
    %881 = vmatprep.subr.mxu0 0.0
    %882 = vmatpush1.msra.mxu0 0.0
    %883 = vmatprep.subr.mxu0 0.0
    %884 = vmatpush1.msra.mxu0 %v846
    %885 = vmatprep.subr.mxu0 0.0
    %886 = vmatpush1.msra.mxu0 %v844
    %887 = vmatprep.subr.mxu0 0.0
    %888 = vmatpush2.msra.mxu0 0.0
    %889 = vmatprep.subr.mxu0 0.0
    %890 = vmatpush2.msra.mxu0 0.0
    %891 = vmatprep.subr.mxu0 0.0
    %892 = vmatpush2.msra.mxu0 0.0
    %893 = vmatprep.subr.mxu0 0.0
    %894 = vmatpush2.msra.mxu0 0.0
    %895 = vmatprep.subr.mxu0 0.0
    %896 = vmatpush2.msra.mxu0 0.0
    %897 = vmatprep.subr.mxu0 0.0
    %898 = vmatpush2.msra.mxu0 0.0
    %899 = vmatprep.subr.mxu0 0.0
    %900 = vmatpush2.msra.mxu0 0.0
    %901 = vmatprep.subr.mxu0 0.0
    %902 = vmatpush2.msra.mxu0 0.0
    %903 = vmatprep.subr.mxu0 0.0
    %904 = vmatpush2.msra.mxu0 0.0
    %905 = vmatprep.subr.mxu0 0.0
    %906 = vmatpush2.msra.mxu0 0.0
    %907 = vmatprep.subr.mxu0 0.0
    %908 = vmatpush2.msra.mxu0 0.0
    %909 = vmatprep.subr.mxu0 0.0
    %910 = vmatpush2.msra.mxu0 0.0
    %911 = vmatprep.subr.mxu0 0.0
    %912 = vmatpush2.msra.mxu0 0.0
    %913 = vmatprep.subr.mxu0 0.0
    %914 = vmatpush2.msra.mxu0 0.0
    %915 = vmatprep.subr.mxu0 0.0
    %916 = vmatpush2.msra.mxu0 0.0
    %917 = vmatprep.subr.mxu0 0.0
    %918 = vmatpush2.msra.mxu0 0.0
    %919 = vmatprep.mubr.f32.mxu0 0.0
    %920 = vmatmul.mubr.f32.gmra.mxu0 %v850
    %v921 = vpop.f32.mrf.mxu0
    %v922 = vadd.f32 0.0, %v921
    %v923 = vpop.f32.mrf.mxu0
    %924 = vmatprep.mubr.f32.mxu0 0.0
    %925 = vmatmul.mubr.f32.gmra.mxu0 %v853
    %v926 = vpop.f32.mrf.mxu0
    %v927 = vadd.f32 0.0, %v926
    %v928 = vpop.f32.mrf.mxu0
    %929 = vdwg.mxu0
    %v931 = vsel %vm754, %v837, 0
    %v934 = vsel %vm754, %v838, 0
    %936 = vmatprep.subr.mxu0 0.0
    %937 = vmatpush1.msra.mxu0 0.0
    %938 = vmatprep.subr.mxu0 0.0
    %939 = vmatpush1.msra.mxu0 0.0
    %940 = vmatprep.subr.mxu0 0.0
    %941 = vmatpush1.msra.mxu0 0.0
    %942 = vmatprep.subr.mxu0 0.0
    %943 = vmatpush1.msra.mxu0 0.0
    %944 = vmatprep.subr.mxu0 0.0
    %945 = vmatpush1.msra.mxu0 0.0
    %946 = vmatprep.subr.mxu0 0.0
    %947 = vmatpush1.msra.mxu0 0.0
    %948 = vmatprep.subr.mxu0 0.0
    %949 = vmatpush1.msra.mxu0 0.0
    %950 = vmatprep.subr.mxu0 0.0
    %951 = vmatpush1.msra.mxu0 0.0
    %952 = vmatprep.subr.mxu0 0.0
    %953 = vmatpush1.msra.mxu0 0.0
    %954 = vmatprep.subr.mxu0 0.0
    %955 = vmatpush1.msra.mxu0 0.0
    %956 = vmatprep.subr.mxu0 0.0
    %957 = vmatpush1.msra.mxu0 0.0
    %958 = vmatprep.subr.mxu0 0.0
    %959 = vmatpush1.msra.mxu0 0.0
    %960 = vmatprep.subr.mxu0 0.0
    %961 = vmatpush1.msra.mxu0 0.0
    %962 = vmatprep.subr.mxu0 0.0
    %963 = vmatpush1.msra.mxu0 0.0
    %964 = vmatprep.subr.mxu0 0.0
    %965 = vmatpush1.msra.mxu0 %v846
    %966 = vmatprep.subr.mxu0 0.0
    %967 = vmatpush1.msra.mxu0 %v844
    %968 = vmatprep.subr.mxu0 0.0
    %969 = vmatpush2.msra.mxu0 0.0
    %970 = vmatprep.subr.mxu0 0.0
    %971 = vmatpush2.msra.mxu0 0.0
    %972 = vmatprep.subr.mxu0 0.0
    %973 = vmatpush2.msra.mxu0 0.0
    %974 = vmatprep.subr.mxu0 0.0
    %975 = vmatpush2.msra.mxu0 0.0
    %976 = vmatprep.subr.mxu0 0.0
    %977 = vmatpush2.msra.mxu0 0.0
    %978 = vmatprep.subr.mxu0 0.0
    %979 = vmatpush2.msra.mxu0 0.0
    %980 = vmatprep.subr.mxu0 0.0
    %981 = vmatpush2.msra.mxu0 0.0
    %982 = vmatprep.subr.mxu0 0.0
    %983 = vmatpush2.msra.mxu0 0.0
    %984 = vmatprep.subr.mxu0 0.0
    %985 = vmatpush2.msra.mxu0 0.0
    %986 = vmatprep.subr.mxu0 0.0
    %987 = vmatpush2.msra.mxu0 0.0
    %988 = vmatprep.subr.mxu0 0.0
    %989 = vmatpush2.msra.mxu0 0.0
    %990 = vmatprep.subr.mxu0 0.0
    %991 = vmatpush2.msra.mxu0 0.0
    %992 = vmatprep.subr.mxu0 0.0
    %993 = vmatpush2.msra.mxu0 0.0
    %994 = vmatprep.subr.mxu0 0.0
    %995 = vmatpush2.msra.mxu0 0.0
    %996 = vmatprep.subr.mxu0 0.0
    %997 = vmatpush2.msra.mxu0 0.0
    %998 = vmatprep.subr.mxu0 0.0
    %999 = vmatpush2.msra.mxu0 0.0
    %1000 = vmatprep.mubr.f32.mxu0 0.0
    %1001 = vmatmul.mubr.f32.gmra.mxu0 %v931
    %v1002 = vpop.f32.mrf.mxu0
    %v1003 = vadd.f32 0.0, %v1002
    %v1004 = vpop.f32.mrf.mxu0
    %1005 = vmatprep.mubr.f32.mxu0 0.0
    %1006 = vmatmul.mubr.f32.gmra.mxu0 %v934
    %v1007 = vpop.f32.mrf.mxu0
    %v1008 = vadd.f32 0.0, %v1007
    %v1009 = vpop.f32.mrf.mxu0
    %1010 = vdwg.mxu0
    %1011 = vrot.lane.b32.xlu0 %v240, 80
    %v1012 = vpop.permute.xlu0 %1011
    %1013 = vrot.lane.b32.xlu0 %v242, 80
    %v1014 = vpop.permute.xlu0 %1013
    %v1018 = vsel %vm754, %v839, 0
    %v1021 = vsel %vm754, %v840, 0
    %1023 = vmatprep.subr.mxu0 0.0
    %1024 = vmatpush1.msra.mxu0 0.0
    %1025 = vmatprep.subr.mxu0 0.0
    %1026 = vmatpush1.msra.mxu0 0.0
    %1027 = vmatprep.subr.mxu0 0.0
    %1028 = vmatpush1.msra.mxu0 0.0
    %1029 = vmatprep.subr.mxu0 0.0
    %1030 = vmatpush1.msra.mxu0 0.0
    %1031 = vmatprep.subr.mxu0 0.0
    %1032 = vmatpush1.msra.mxu0 0.0
    %1033 = vmatprep.subr.mxu0 0.0
    %1034 = vmatpush1.msra.mxu0 0.0
    %1035 = vmatprep.subr.mxu0 0.0
    %1036 = vmatpush1.msra.mxu0 0.0
    %1037 = vmatprep.subr.mxu0 0.0
    %1038 = vmatpush1.msra.mxu0 0.0
    %1039 = vmatprep.subr.mxu0 0.0
    %1040 = vmatpush1.msra.mxu0 0.0
    %1041 = vmatprep.subr.mxu0 0.0
    %1042 = vmatpush1.msra.mxu0 0.0
    %1043 = vmatprep.subr.mxu0 0.0
    %1044 = vmatpush1.msra.mxu0 0.0
    %1045 = vmatprep.subr.mxu0 0.0
    %1046 = vmatpush1.msra.mxu0 0.0
    %1047 = vmatprep.subr.mxu0 0.0
    %1048 = vmatpush1.msra.mxu0 0.0
    %1049 = vmatprep.subr.mxu0 0.0
    %1050 = vmatpush1.msra.mxu0 0.0
    %1051 = vmatprep.subr.mxu0 0.0
    %1052 = vmatpush1.msra.mxu0 %v1014
    %1053 = vmatprep.subr.mxu0 0.0
    %1054 = vmatpush1.msra.mxu0 %v1012
    %1055 = vmatprep.subr.mxu0 0.0
    %1056 = vmatpush2.msra.mxu0 0.0
    %1057 = vmatprep.subr.mxu0 0.0
    %1058 = vmatpush2.msra.mxu0 0.0
    %1059 = vmatprep.subr.mxu0 0.0
    %1060 = vmatpush2.msra.mxu0 0.0
    %1061 = vmatprep.subr.mxu0 0.0
    %1062 = vmatpush2.msra.mxu0 0.0
    %1063 = vmatprep.subr.mxu0 0.0
    %1064 = vmatpush2.msra.mxu0 0.0
    %1065 = vmatprep.subr.mxu0 0.0
    %1066 = vmatpush2.msra.mxu0 0.0
    %1067 = vmatprep.subr.mxu0 0.0
    %1068 = vmatpush2.msra.mxu0 0.0
    %1069 = vmatprep.subr.mxu0 0.0
    %1070 = vmatpush2.msra.mxu0 0.0
    %1071 = vmatprep.subr.mxu0 0.0
    %1072 = vmatpush2.msra.mxu0 0.0
    %1073 = vmatprep.subr.mxu0 0.0
    %1074 = vmatpush2.msra.mxu0 0.0
    %1075 = vmatprep.subr.mxu0 0.0
    %1076 = vmatpush2.msra.mxu0 0.0
    %1077 = vmatprep.subr.mxu0 0.0
    %1078 = vmatpush2.msra.mxu0 0.0
    %1079 = vmatprep.subr.mxu0 0.0
    %1080 = vmatpush2.msra.mxu0 0.0
    %1081 = vmatprep.subr.mxu0 0.0
    %1082 = vmatpush2.msra.mxu0 0.0
    %1083 = vmatprep.subr.mxu0 0.0
    %1084 = vmatpush2.msra.mxu0 0.0
    %1085 = vmatprep.subr.mxu0 0.0
    %1086 = vmatpush2.msra.mxu0 0.0
    %1087 = vmatprep.mubr.f32.mxu0 0.0
    %1088 = vmatmul.mubr.f32.gmra.mxu0 %v1018
    %v1089 = vpop.f32.mrf.mxu0
    %v1090 = vadd.f32 0.0, %v1089
    %v1091 = vpop.f32.mrf.mxu0
    %1092 = vmatprep.mubr.f32.mxu0 0.0
    %1093 = vmatmul.mubr.f32.gmra.mxu0 %v1021
    %v1094 = vpop.f32.mrf.mxu0
    %v1095 = vadd.f32 0.0, %v1094
    %v1096 = vpop.f32.mrf.mxu0
    %1097 = vdwg.mxu0
    %v1099 = vsel %vm754, %v841, 0
    %v1102 = vsel %vm754, %v842, 0
    %1104 = vmatprep.subr.mxu0 0.0
    %1105 = vmatpush1.msra.mxu0 0.0
    %1106 = vmatprep.subr.mxu0 0.0
    %1107 = vmatpush1.msra.mxu0 0.0
    %1108 = vmatprep.subr.mxu0 0.0
    %1109 = vmatpush1.msra.mxu0 0.0
    %1110 = vmatprep.subr.mxu0 0.0
    %1111 = vmatpush1.msra.mxu0 0.0
    %1112 = vmatprep.subr.mxu0 0.0
    %1113 = vmatpush1.msra.mxu0 0.0
    %1114 = vmatprep.subr.mxu0 0.0
    %1115 = vmatpush1.msra.mxu0 0.0
    %1116 = vmatprep.subr.mxu0 0.0
    %1117 = vmatpush1.msra.mxu0 0.0
    %1118 = vmatprep.subr.mxu0 0.0
    %1119 = vmatpush1.msra.mxu0 0.0
    %1120 = vmatprep.subr.mxu0 0.0
    %1121 = vmatpush1.msra.mxu0 0.0
    %1122 = vmatprep.subr.mxu0 0.0
    %1123 = vmatpush1.msra.mxu0 0.0
    %1124 = vmatprep.subr.mxu0 0.0
    %1125 = vmatpush1.msra.mxu0 0.0
    %1126 = vmatprep.subr.mxu0 0.0
    %1127 = vmatpush1.msra.mxu0 0.0
    %1128 = vmatprep.subr.mxu0 0.0
    %1129 = vmatpush1.msra.mxu0 0.0
    %1130 = vmatprep.subr.mxu0 0.0
    %1131 = vmatpush1.msra.mxu0 0.0
    %1132 = vmatprep.subr.mxu0 0.0
    %1133 = vmatpush1.msra.mxu0 %v1014
    %1134 = vmatprep.subr.mxu0 0.0
    %1135 = vmatpush1.msra.mxu0 %v1012
    %1136 = vmatprep.subr.mxu0 0.0
    %1137 = vmatpush2.msra.mxu0 0.0
    %1138 = vmatprep.subr.mxu0 0.0
    %1139 = vmatpush2.msra.mxu0 0.0
    %1140 = vmatprep.subr.mxu0 0.0
    %1141 = vmatpush2.msra.mxu0 0.0
    %1142 = vmatprep.subr.mxu0 0.0
    %1143 = vmatpush2.msra.mxu0 0.0
    %1144 = vmatprep.subr.mxu0 0.0
    %1145 = vmatpush2.msra.mxu0 0.0
    %1146 = vmatprep.subr.mxu0 0.0
    %1147 = vmatpush2.msra.mxu0 0.0
    %1148 = vmatprep.subr.mxu0 0.0
    %1149 = vmatpush2.msra.mxu0 0.0
    %1150 = vmatprep.subr.mxu0 0.0
    %1151 = vmatpush2.msra.mxu0 0.0
    %1152 = vmatprep.subr.mxu0 0.0
    %1153 = vmatpush2.msra.mxu0 0.0
    %1154 = vmatprep.subr.mxu0 0.0
    %1155 = vmatpush2.msra.mxu0 0.0
    %1156 = vmatprep.subr.mxu0 0.0
    %1157 = vmatpush2.msra.mxu0 0.0
    %1158 = vmatprep.subr.mxu0 0.0
    %1159 = vmatpush2.msra.mxu0 0.0
    %1160 = vmatprep.subr.mxu0 0.0
    %1161 = vmatpush2.msra.mxu0 0.0
    %1162 = vmatprep.subr.mxu0 0.0
    %1163 = vmatpush2.msra.mxu0 0.0
    %1164 = vmatprep.subr.mxu0 0.0
    %1165 = vmatpush2.msra.mxu0 0.0
    %1166 = vmatprep.subr.mxu0 0.0
    %1167 = vmatpush2.msra.mxu0 0.0
    %1168 = vmatprep.mubr.f32.mxu0 0.0
    %1169 = vmatmul.mubr.f32.gmra.mxu0 %v1099
    %v1170 = vpop.f32.mrf.mxu0
    %v1171 = vadd.f32 0.0, %v1170
    %v1172 = vpop.f32.mrf.mxu0
    %1173 = vmatprep.mubr.f32.mxu0 0.0
    %1174 = vmatmul.mubr.f32.gmra.mxu0 %v1102
    %v1175 = vpop.f32.mrf.mxu0
    %v1176 = vadd.f32 0.0, %v1175
    %v1177 = vpop.f32.mrf.mxu0
    %1178 = vdwg.mxu0
    %1181 = vrot.lane.b32.xlu0 %v1003, 8
    %v1182 = vpop.permute.xlu0 %1181
    %1183 = vrot.lane.b32.xlu0 %v1008, 8
    %v1184 = vpop.permute.xlu0 %1183
    %1189 = vrot.lane.b32.xlu0 %v1090, 16
    %v1190 = vpop.permute.xlu0 %1189
    %1191 = vrot.lane.b32.xlu0 %v1095, 16
    %v1192 = vpop.permute.xlu0 %1191
    %1197 = vrot.lane.b32.xlu0 %v1171, 24
    %v1198 = vpop.permute.xlu0 %1197
    %1199 = vrot.lane.b32.xlu0 %v1176, 24
    %v1200 = vpop.permute.xlu0 %1199
    %v1203 = vsel %vm417, %v922, %v1182
    %v1204 = vsel %vm417, %v927, %v1184
    %v1205 = vsel %vm754, %v1203, %v1190
    %v1206 = vsel %vm754, %v1204, %v1192
    %vm1207 = vcmask 195584
    %v1208 = vsel %vm1207, %v1205, %v1198
    %v1209 = vsel %vm1207, %v1206, %v1200
    %v1210 = vld [vmem:[%s7] sm:$0xff]
    %v1211 = vld [vmem:[%s7 + $0x8] sm:$0xff]
    %v1212 = vld [vmem:[%s7 + $0x10] sm:$0xff]
    %v1213 = vld [vmem:[%s7 + $0x18] sm:$0xff]
    %v1215 = vsel %vm119, %v1208, 0
    %v1218 = vsel %vm119, %v1209, 0
    %1220 = vmatprep.subr.mxu0 0.0
    %1221 = vmatpush1.msra.mxu0 0.0
    %1222 = vmatprep.subr.mxu0 0.0
    %1223 = vmatpush1.msra.mxu0 0.0
    %1224 = vmatprep.subr.mxu0 0.0
    %1225 = vmatpush1.msra.mxu0 0.0
    %1226 = vmatprep.subr.mxu0 0.0
    %1227 = vmatpush1.msra.mxu0 0.0
    %1228 = vmatprep.subr.mxu0 0.0
    %1229 = vmatpush1.msra.mxu0 0.0
    %1230 = vmatprep.subr.mxu0 0.0
    %1231 = vmatpush1.msra.mxu0 0.0
    %1232 = vmatprep.subr.mxu0 0.0
    %1233 = vmatpush1.msra.mxu0 0.0
    %1234 = vmatprep.subr.mxu0 0.0
    %1235 = vmatpush1.msra.mxu0 0.0
    %1236 = vmatprep.subr.mxu0 0.0
    %1237 = vmatpush1.msra.mxu0 0.0
    %1238 = vmatprep.subr.mxu0 0.0
    %1239 = vmatpush1.msra.mxu0 0.0
    %1240 = vmatprep.subr.mxu0 0.0
    %1241 = vmatpush1.msra.mxu0 0.0
    %1242 = vmatprep.subr.mxu0 0.0
    %1243 = vmatpush1.msra.mxu0 0.0
    %1244 = vmatprep.subr.mxu0 0.0
    %1245 = vmatpush1.msra.mxu0 %v1213
    %1246 = vmatprep.subr.mxu0 0.0
    %1247 = vmatpush1.msra.mxu0 %v1212
    %1248 = vmatprep.subr.mxu0 0.0
    %1249 = vmatpush1.msra.mxu0 %v1211
    %1250 = vmatprep.subr.mxu0 0.0
    %1251 = vmatpush1.msra.mxu0 %v1210
    %1252 = vmatprep.subr.mxu0 0.0
    %1253 = vmatpush2.msra.mxu0 0.0
    %1254 = vmatprep.subr.mxu0 0.0
    %1255 = vmatpush2.msra.mxu0 0.0
    %1256 = vmatprep.subr.mxu0 0.0
    %1257 = vmatpush2.msra.mxu0 0.0
    %1258 = vmatprep.subr.mxu0 0.0
    %1259 = vmatpush2.msra.mxu0 0.0
    %1260 = vmatprep.subr.mxu0 0.0
    %1261 = vmatpush2.msra.mxu0 0.0
    %1262 = vmatprep.subr.mxu0 0.0
    %1263 = vmatpush2.msra.mxu0 0.0
    %1264 = vmatprep.subr.mxu0 0.0
    %1265 = vmatpush2.msra.mxu0 0.0
    %1266 = vmatprep.subr.mxu0 0.0
    %1267 = vmatpush2.msra.mxu0 0.0
    %1268 = vmatprep.subr.mxu0 0.0
    %1269 = vmatpush2.msra.mxu0 0.0
    %1270 = vmatprep.subr.mxu0 0.0
    %1271 = vmatpush2.msra.mxu0 0.0
    %1272 = vmatprep.subr.mxu0 0.0
    %1273 = vmatpush2.msra.mxu0 0.0
    %1274 = vmatprep.subr.mxu0 0.0
    %1275 = vmatpush2.msra.mxu0 0.0
    %1276 = vmatprep.subr.mxu0 0.0
    %1277 = vmatpush2.msra.mxu0 0.0
    %1278 = vmatprep.subr.mxu0 0.0
    %1279 = vmatpush2.msra.mxu0 0.0
    %1280 = vmatprep.subr.mxu0 0.0
    %1281 = vmatpush2.msra.mxu0 0.0
    %1282 = vmatprep.subr.mxu0 0.0
    %1283 = vmatpush2.msra.mxu0 0.0
    %1284 = vmatprep.mubr.f32.mxu0 0.0
    %1285 = vmatmul.mubr.f32.gmra.mxu0 %v1215
    %v1286 = vpop.f32.mrf.mxu0
    %v1287 = vadd.f32 0.0, %v1286
    %v1288 = vpop.f32.mrf.mxu0
    %1289 = vmatprep.mubr.f32.mxu0 0.0
    %1290 = vmatmul.mubr.f32.gmra.mxu0 %v1218
    %v1291 = vpop.f32.mrf.mxu0
    %v1292 = vadd.f32 0.0, %v1291
    %v1293 = vpop.f32.mrf.mxu0
    %1294 = vdwg.mxu0
    %v1295 = vadd.f32 %v114, %v1287
    %v1296 = vadd.f32 %v115, %v1292
    %v1297 = vld [vmem:[#allocation11] sm:$0x1]
    %v1298 = vmul.f32 %v1295, %v1295
    %v1299 = vmul.f32 %v1296, %v1296
    %v1300 = vsel %vm119, %v1298, 0.0
    %1301 = vadd.xlane.f32.xlu0 %v1300
    %v1302 = vpop.xlane.xlu0 %1301
    %v1303 = vsel %vm119, %v1299, 0.0
    %1304 = vadd.xlane.f32.xlu0 %v1303
    %v1305 = vpop.xlane.xlu0 %1304
    %v1306 = vmul.f32 %v1302, %v126
    %v1307 = vmul.f32 %v1305, %v126
    %v1308 = vadd.f32 %v1306, 1e-06
    %v1309 = vadd.f32 %v1307, 1e-06
    %v1310 = vrsqrt.pop %v1308
    %v1311 = vrsqrt.pop %v1309
    %v1312 = vmul.f32 %v1295, %v1310
    %v1313 = vmul.f32 %v1296, %v1311
    %v1315 = vlaneseq
    %v1316 = vshrl.u32 %v1315, 7
    %v1317 = vsub.s32 0, %v1316
    %v1318 = vrot.slane %v1297, %v1317
    %v1320 = vmul.f32 %v1312, %v1318
    %v1321 = vmul.f32 %v1313, %v1318
    %v1322 = vld [vmem:[%s9] sm:$0xff]
    %v1323 = vld [vmem:[%s9 + $0x8] sm:$0xff]
    %v1324 = vld [vmem:[%s9 + $0x10] sm:$0xff]
    %v1325 = vld [vmem:[%s9 + $0x18] sm:$0xff]
    %v1326 = vld [vmem:[%s9 + $0x20] sm:$0xff]
    %v1327 = vld [vmem:[%s9 + $0x28] sm:$0xff]
    %v1328 = vld [vmem:[%s9 + $0x30] sm:$0xff]
    %v1329 = vld [vmem:[%s9 + $0x38] sm:$0xff]
    %v1330 = vld [vmem:[%s9 + $0x40] sm:$0xff]
    %v1331 = vld [vmem:[%s9 + $0x48] sm:$0xff]
    %v1332 = vld [vmem:[%s9 + $0x50] sm:$0xff]
    %v1333 = vld [vmem:[%s9 + $0x58] sm:$0xff]
    %v1335 = vsel %vm119, %v1320, 0
    %v1338 = vsel %vm119, %v1321, 0
    %1340 = vmatprep.subr.mxu0 0.0
    %1341 = vmatpush1.msra.mxu0 0.0
    %1342 = vmatprep.subr.mxu0 0.0
    %1343 = vmatpush1.msra.mxu0 0.0
    %1344 = vmatprep.subr.mxu0 0.0
    %1345 = vmatpush1.msra.mxu0 0.0
    %1346 = vmatprep.subr.mxu0 0.0
    %1347 = vmatpush1.msra.mxu0 0.0
    %1348 = vmatprep.subr.mxu0 0.0
    %1349 = vmatpush1.msra.mxu0 0.0
    %1350 = vmatprep.subr.mxu0 0.0
    %1351 = vmatpush1.msra.mxu0 0.0
    %1352 = vmatprep.subr.mxu0 0.0
    %1353 = vmatpush1.msra.mxu0 0.0
    %1354 = vmatprep.subr.mxu0 0.0
    %1355 = vmatpush1.msra.mxu0 0.0
    %1356 = vmatprep.subr.mxu0 0.0
    %1357 = vmatpush1.msra.mxu0 0.0
    %1358 = vmatprep.subr.mxu0 0.0
    %1359 = vmatpush1.msra.mxu0 0.0
    %1360 = vmatprep.subr.mxu0 0.0
    %1361 = vmatpush1.msra.mxu0 0.0
    %1362 = vmatprep.subr.mxu0 0.0
    %1363 = vmatpush1.msra.mxu0 0.0
    %1364 = vmatprep.subr.mxu0 %v1332
    %1365 = vmatpush1.msra.mxu0 %v1331
    %1366 = vmatprep.subr.mxu0 %v1329
    %1367 = vmatpush1.msra.mxu0 %v1328
    %1368 = vmatprep.subr.mxu0 %v1326
    %1369 = vmatpush1.msra.mxu0 %v1325
    %1370 = vmatprep.subr.mxu0 %v1323
    %1371 = vmatpush1.msra.mxu0 %v1322
    %1372 = vmatprep.subr.mxu0 0.0
    %1373 = vmatpush2.msra.mxu0 0.0
    %1374 = vmatprep.subr.mxu0 0.0
    %1375 = vmatpush2.msra.mxu0 0.0
    %1376 = vmatprep.subr.mxu0 0.0
    %1377 = vmatpush2.msra.mxu0 0.0
    %1378 = vmatprep.subr.mxu0 0.0
    %1379 = vmatpush2.msra.mxu0 0.0
    %1380 = vmatprep.subr.mxu0 0.0
    %1381 = vmatpush2.msra.mxu0 0.0
    %1382 = vmatprep.subr.mxu0 0.0
    %1383 = vmatpush2.msra.mxu0 0.0
    %1384 = vmatprep.subr.mxu0 0.0
    %1385 = vmatpush2.msra.mxu0 0.0
    %1386 = vmatprep.subr.mxu0 0.0
    %1387 = vmatpush2.msra.mxu0 0.0
    %1388 = vmatprep.subr.mxu0 0.0
    %1389 = vmatpush2.msra.mxu0 0.0
    %1390 = vmatprep.subr.mxu0 0.0
    %1391 = vmatpush2.msra.mxu0 0.0
    %1392 = vmatprep.subr.mxu0 0.0
    %1393 = vmatpush2.msra.mxu0 0.0
    %1394 = vmatprep.subr.mxu0 0.0
    %1395 = vmatpush2.msra.mxu0 0.0
    %1396 = vmatprep.subr.mxu0 0.0
    %1397 = vmatpush2.msra.mxu0 0.0
    %1398 = vmatprep.subr.mxu0 0.0
    %1399 = vmatpush2.msra.mxu0 0.0
    %1400 = vmatprep.subr.mxu0 0.0
    %1401 = vmatpush2.msra.mxu0 0.0
    %1402 = vmatprep.subr.mxu0 0.0
    %1403 = vmatpush2.msra.mxu0 0.0
    %1404 = vmatprep.mubr.f32.mxu0 0.0
    %1405 = vmatmul.mubr.f32.gmra.mxu0 %v1335
    %v1406 = vpop.f32.mrf.mxu0
    %v1407 = vadd.f32 0.0, %v1406
    %v1408 = vpop.f32.mrf.mxu0
    %v1409 = vadd.f32 0.0, %v1408
    %1410 = vmatprep.mubr.f32.mxu0 0.0
    %1411 = vmatmul.mubr.f32.gmra.mxu0 %v1338
    %v1412 = vpop.f32.mrf.mxu0
    %v1413 = vadd.f32 0.0, %v1412
    %v1414 = vpop.f32.mrf.mxu0
    %v1415 = vadd.f32 0.0, %v1414
    %1416 = vdwg.mxu0
    %1417 = vmatprep.subr.mxu0 0.0
    %1418 = vmatpush1.msra.mxu0 0.0
    %1419 = vmatprep.subr.mxu0 0.0
    %1420 = vmatpush1.msra.mxu0 0.0
    %1421 = vmatprep.subr.mxu0 0.0
    %1422 = vmatpush1.msra.mxu0 0.0
    %1423 = vmatprep.subr.mxu0 0.0
    %1424 = vmatpush1.msra.mxu0 0.0
    %1425 = vmatprep.subr.mxu0 0.0
    %1426 = vmatpush1.msra.mxu0 0.0
    %1427 = vmatprep.subr.mxu0 0.0
    %1428 = vmatpush1.msra.mxu0 0.0
    %1429 = vmatprep.subr.mxu0 0.0
    %1430 = vmatpush1.msra.mxu0 0.0
    %1431 = vmatprep.subr.mxu0 0.0
    %1432 = vmatpush1.msra.mxu0 0.0
    %1433 = vmatprep.subr.mxu0 0.0
    %1434 = vmatpush1.msra.mxu0 0.0
    %1435 = vmatprep.subr.mxu0 0.0
    %1436 = vmatpush1.msra.mxu0 0.0
    %1437 = vmatprep.subr.mxu0 0.0
    %1438 = vmatpush1.msra.mxu0 0.0
    %1439 = vmatprep.subr.mxu0 0.0
    %1440 = vmatpush1.msra.mxu0 0.0
    %1441 = vmatprep.subr.mxu0 0.0
    %1442 = vmatpush1.msra.mxu0 %v1333
    %1443 = vmatprep.subr.mxu0 0.0
    %1444 = vmatpush1.msra.mxu0 %v1330
    %1445 = vmatprep.subr.mxu0 0.0
    %1446 = vmatpush1.msra.mxu0 %v1327
    %1447 = vmatprep.subr.mxu0 0.0
    %1448 = vmatpush1.msra.mxu0 %v1324
    %1449 = vmatprep.subr.mxu0 0.0
    %1450 = vmatpush2.msra.mxu0 0.0
    %1451 = vmatprep.subr.mxu0 0.0
    %1452 = vmatpush2.msra.mxu0 0.0
    %1453 = vmatprep.subr.mxu0 0.0
    %1454 = vmatpush2.msra.mxu0 0.0
    %1455 = vmatprep.subr.mxu0 0.0
    %1456 = vmatpush2.msra.mxu0 0.0
    %1457 = vmatprep.subr.mxu0 0.0
    %1458 = vmatpush2.msra.mxu0 0.0
    %1459 = vmatprep.subr.mxu0 0.0
    %1460 = vmatpush2.msra.mxu0 0.0
    %1461 = vmatprep.subr.mxu0 0.0
    %1462 = vmatpush2.msra.mxu0 0.0
    %1463 = vmatprep.subr.mxu0 0.0
    %1464 = vmatpush2.msra.mxu0 0.0
    %1465 = vmatprep.subr.mxu0 0.0
    %1466 = vmatpush2.msra.mxu0 0.0
    %1467 = vmatprep.subr.mxu0 0.0
    %1468 = vmatpush2.msra.mxu0 0.0
    %1469 = vmatprep.subr.mxu0 0.0
    %1470 = vmatpush2.msra.mxu0 0.0
    %1471 = vmatprep.subr.mxu0 0.0
    %1472 = vmatpush2.msra.mxu0 0.0
    %1473 = vmatprep.subr.mxu0 0.0
    %1474 = vmatpush2.msra.mxu0 0.0
    %1475 = vmatprep.subr.mxu0 0.0
    %1476 = vmatpush2.msra.mxu0 0.0
    %1477 = vmatprep.subr.mxu0 0.0
    %1478 = vmatpush2.msra.mxu0 0.0
    %1479 = vmatprep.subr.mxu0 0.0
    %1480 = vmatpush2.msra.mxu0 0.0
    %1481 = vmatprep.mubr.f32.mxu0 0.0
    %1482 = vmatmul.mubr.f32.gmra.mxu0 %v1335
    %v1483 = vpop.f32.mrf.mxu0
    %v1484 = vadd.f32 0.0, %v1483
    %v1485 = vpop.f32.mrf.mxu0
    %1486 = vmatprep.mubr.f32.mxu0 0.0
    %1487 = vmatmul.mubr.f32.gmra.mxu0 %v1338
    %v1488 = vpop.f32.mrf.mxu0
    %v1489 = vadd.f32 0.0, %v1488
    %v1490 = vpop.f32.mrf.mxu0
    %1491 = vdwg.mxu0
    %v1492 = vld [vmem:[%s10] sm:$0x1]
    %v1494 = vlaneseq
    %v1495 = vshrl.u32 %v1494, 7
    %v1496 = vsub.s32 0, %v1495
    %v1497 = vrot.slane %v1492, %v1496
    %v1499 = vadd.f32 %v1484, %v1497
    %v1500 = vadd.f32 %v1489, %v1497
    %1503 = vrot.lane.b32.xlu0 %v1499, 127
    %v1504 = vpop.permute.xlu0 %1503
    %1505 = vrot.lane.b32.xlu0 %v1500, 127
    %v1506 = vpop.permute.xlu0 %1505
    %vm1509 = vcmp.ge.f32.partialorder %v1499, %v1504
    %vm1510 = vcmp.ge.f32.partialorder %v1500, %v1506
    %v1511 = vsel %vm1509, 1, 0
    %v1512 = vsel %vm1510, 1, 0
    %v1513 = vcvt.s32.f32 %v1511
    %v1514 = vcvt.s32.f32 %v1512
    %v1515 = vsub.f32 1.0, %v1513
    %v1516 = vsub.f32 1.0, %v1514
    %v1517 = vxor.u32 %v1407, 2147483648
    %v1518 = vxor.u32 %v1413, 2147483648
    %v1519 = vmul.f32 %v1517, 1.442695
    %v1520 = vpow.pop %v1519
    %v1521 = vmul.f32 %v1518, 1.442695
    %v1522 = vpow.pop %v1521
    %v1523 = vadd.f32 %v1520, 1.0
    %v1524 = vadd.f32 %v1522, 1.0
    %v1525 = vrcp.pop %v1523
    %v1526 = vmul.f32 1.0, %v1525
    %v1527 = vrcp.pop %v1524
    %v1528 = vmul.f32 1.0, %v1527
    %v1529 = vmul.f32 %v1407, %v1526
    %v1530 = vmul.f32 %v1413, %v1528
    %1533 = vrot.lane.b32.xlu0 %v1407, 64
    %v1534 = vpop.permute.xlu0 %1533
    %1535 = vrot.lane.b32.xlu0 %v1413, 64
    %v1536 = vpop.permute.xlu0 %1535
    %v1539 = vmul.f32 %v1529, %v1534
    %v1540 = vmul.f32 %v1530, %v1536
    %1542 = vset.pattern.permute.xlu0 0
    %1543 = vperm.xlu0 %1542, %v1513
    %v1544 = vpop.permute.xlu0 %1543
    %1547 = vset.pattern.permute.xlu0 0
    %1548 = vperm.xlu0 %1547, %v1514
    %v1549 = vpop.permute.xlu0 %1548
    %v1551 = vmul.f32 %v1544, %v1539
    %v1552 = vmul.f32 %v1549, %v1540
    %v1553 = vxor.u32 %v1409, 2147483648
    %v1554 = vxor.u32 %v1415, 2147483648
    %v1555 = vmul.f32 %v1553, 1.442695
    %v1556 = vpow.pop %v1555
    %v1557 = vmul.f32 %v1554, 1.442695
    %v1558 = vpow.pop %v1557
    %v1559 = vadd.f32 %v1556, 1.0
    %v1560 = vadd.f32 %v1558, 1.0
    %v1561 = vrcp.pop %v1559
    %v1562 = vmul.f32 1.0, %v1561
    %v1563 = vrcp.pop %v1560
    %v1564 = vmul.f32 1.0, %v1563
    %v1565 = vmul.f32 %v1409, %v1562
    %v1566 = vmul.f32 %v1415, %v1564
    %1569 = vrot.lane.b32.xlu0 %v1409, 64
    %v1570 = vpop.permute.xlu0 %1569
    %1571 = vrot.lane.b32.xlu0 %v1415, 64
    %v1572 = vpop.permute.xlu0 %1571
    %v1575 = vmul.f32 %v1565, %v1570
    %v1576 = vmul.f32 %v1566, %v1572
    %1578 = vset.pattern.permute.xlu0 0
    %1579 = vperm.xlu0 %1578, %v1515
    %v1580 = vpop.permute.xlu0 %1579
    %1583 = vset.pattern.permute.xlu0 0
    %1584 = vperm.xlu0 %1583, %v1516
    %v1585 = vpop.permute.xlu0 %1584
    %v1587 = vmul.f32 %v1580, %v1575
    %v1588 = vmul.f32 %v1585, %v1576
    %1591 = vrot.lane.b32.xlu0 %v1587, 64
    %v1592 = vpop.permute.xlu0 %1591
    %1593 = vrot.lane.b32.xlu0 %v1588, 64
    %v1594 = vpop.permute.xlu0 %1593
    %vm1597 = vcmask 523264
    %v1598 = vsel %vm1597, %v1551, %v1592
    %v1599 = vsel %vm1597, %v1552, %v1594
    %v1600 = vld [vmem:[%s11] sm:$0xff]
    %v1601 = vld [vmem:[%s11 + $0x8] sm:$0xff]
    %v1602 = vld [vmem:[%s11 + $0x10] sm:$0xff]
    %v1603 = vld [vmem:[%s11 + $0x18] sm:$0xff]
    %v1604 = vld [vmem:[%s11 + $0x20] sm:$0xff]
    %v1605 = vld [vmem:[%s11 + $0x28] sm:$0xff]
    %v1606 = vld [vmem:[%s11 + $0x30] sm:$0xff]
    %v1607 = vld [vmem:[%s11 + $0x38] sm:$0xff]
    %v1608 = vld [vmem:[%s11 + $0x40] sm:$0xff]
    %v1609 = vld [vmem:[%s11 + $0x48] sm:$0xff]
    %v1610 = vld [vmem:[%s11 + $0x50] sm:$0xff]
    %v1611 = vld [vmem:[%s11 + $0x58] sm:$0xff]
    %v1612 = vld [vmem:[%s11 + $0x60] sm:$0xff]
    %v1613 = vld [vmem:[%s11 + $0x68] sm:$0xff]
    %v1614 = vld [vmem:[%s11 + $0x70] sm:$0xff]
    %v1615 = vld [vmem:[%s11 + $0x78] sm:$0xff]
    %1616 = vmatprep.subr.mxu0 0.0
    %1617 = vmatpush1.msra.mxu0 %v1615
    %1618 = vmatprep.subr.mxu0 0.0
    %1619 = vmatpush1.msra.mxu0 %v1614
    %1620 = vmatprep.subr.mxu0 0.0
    %1621 = vmatpush1.msra.mxu0 %v1613
    %1622 = vmatprep.subr.mxu0 0.0
    %1623 = vmatpush1.msra.mxu0 %v1612
    %1624 = vmatprep.subr.mxu0 0.0
    %1625 = vmatpush1.msra.mxu0 %v1611
    %1626 = vmatprep.subr.mxu0 0.0
    %1627 = vmatpush1.msra.mxu0 %v1610
    %1628 = vmatprep.subr.mxu0 0.0
    %1629 = vmatpush1.msra.mxu0 %v1609
    %1630 = vmatprep.subr.mxu0 0.0
    %1631 = vmatpush1.msra.mxu0 %v1608
    %1632 = vmatprep.subr.mxu0 0.0
    %1633 = vmatpush1.msra.mxu0 %v1607
    %1634 = vmatprep.subr.mxu0 0.0
    %1635 = vmatpush1.msra.mxu0 %v1606
    %1636 = vmatprep.subr.mxu0 0.0
    %1637 = vmatpush1.msra.mxu0 %v1605
    %1638 = vmatprep.subr.mxu0 0.0
    %1639 = vmatpush1.msra.mxu0 %v1604
    %1640 = vmatprep.subr.mxu0 0.0
    %1641 = vmatpush1.msra.mxu0 %v1603
    %1642 = vmatprep.subr.mxu0 0.0
    %1643 = vmatpush1.msra.mxu0 %v1602
    %1644 = vmatprep.subr.mxu0 0.0
    %1645 = vmatpush1.msra.mxu0 %v1601
    %1646 = vmatprep.subr.mxu0 0.0
    %1647 = vmatpush1.msra.mxu0 %v1600
    %1648 = vmatprep.subr.mxu0 0.0
    %1649 = vmatpush2.msra.mxu0 0.0
    %1650 = vmatprep.subr.mxu0 0.0
    %1651 = vmatpush2.msra.mxu0 0.0
    %1652 = vmatprep.subr.mxu0 0.0
    %1653 = vmatpush2.msra.mxu0 0.0
    %1654 = vmatprep.subr.mxu0 0.0
    %1655 = vmatpush2.msra.mxu0 0.0
    %1656 = vmatprep.subr.mxu0 0.0
    %1657 = vmatpush2.msra.mxu0 0.0
    %1658 = vmatprep.subr.mxu0 0.0
    %1659 = vmatpush2.msra.mxu0 0.0
    %1660 = vmatprep.subr.mxu0 0.0
    %1661 = vmatpush2.msra.mxu0 0.0
    %1662 = vmatprep.subr.mxu0 0.0
    %1663 = vmatpush2.msra.mxu0 0.0
    %1664 = vmatprep.subr.mxu0 0.0
    %1665 = vmatpush2.msra.mxu0 0.0
    %1666 = vmatprep.subr.mxu0 0.0
    %1667 = vmatpush2.msra.mxu0 0.0
    %1668 = vmatprep.subr.mxu0 0.0
    %1669 = vmatpush2.msra.mxu0 0.0
    %1670 = vmatprep.subr.mxu0 0.0
    %1671 = vmatpush2.msra.mxu0 0.0
    %1672 = vmatprep.subr.mxu0 0.0
    %1673 = vmatpush2.msra.mxu0 0.0
    %1674 = vmatprep.subr.mxu0 0.0
    %1675 = vmatpush2.msra.mxu0 0.0
    %1676 = vmatprep.subr.mxu0 0.0
    %1677 = vmatpush2.msra.mxu0 0.0
    %1678 = vmatprep.subr.mxu0 0.0
    %1679 = vmatpush2.msra.mxu0 0.0
    %1680 = vmatprep.mubr.f32.mxu0 0.0
    %1681 = vmatmul.mubr.f32.gmra.mxu0 %v1598
    %v1682 = vpop.f32.mrf.mxu0
    %v1683 = vadd.f32 0.0, %v1682
    %v1684 = vpop.f32.mrf.mxu0
    %1685 = vmatprep.mubr.f32.mxu0 0.0
    %1686 = vmatmul.mubr.f32.gmra.mxu0 %v1599
    %v1687 = vpop.f32.mrf.mxu0
    %v1688 = vadd.f32 0.0, %v1687
    %v1689 = vpop.f32.mrf.mxu0
    %1690 = vdwg.mxu0
    %v1691 = vadd.f32 %v1295, %v1683
    %v1692 = vadd.f32 %v1296, %v1688
    %1693 = vst.msk [vmem:[#allocation13] sm:$0xff] %vm119, %v1691
    %1694 = vst.msk [vmem:[#allocation13 + $0x8] sm:$0xff] %vm119, %v1692
    // Predicated region
    $region74: #{tpu_custom_call.1} parent=1 // pred_check
      _
    $region75: #{tpu_custom_call.1} parent=1 // pred_check_branch
      %1696 = sbr.rel (0) target = $region77
    $region76: #{tpu_custom_call.1} parent=1 // pred_region
      %s1698 = ssub.s32 256, 256
      %1699 = vsyncadd [#allocation4], %s1698
      %s1700 = sshll.u32 [#allocation13], 4
      %s1701 = int_to_ptr.vmem [resolvable:$true] %s1700
      %1706 = dma.vmem_to_hbm [thread:$0]  %s1701, 256, %s12, [#allocation4], 128, 128, 8
    $region77: #{tpu_custom_call.1} parent=1 // pred_fallthru
      _
    // Predicated region
    $region78: #{tpu_custom_call.1} parent=1 // pred_check
      _
    $region79: #{tpu_custom_call.1} parent=1 // pred_check_branch
      %1708 = sbr.rel (0) target = $region81
    $region80: #{tpu_custom_call.1} parent=1 // pred_region
      %1709 = dma.done [#allocation4], 256
    $region81: #{tpu_custom_call.1} parent=1 // pred_fallthru
      _
    %1710 = vsyncpa [#allocation3], 1
    %1711 = vsyncpa [#allocation6], 1
    %1712 = vsyncpa [#allocation9], 1
    %1713 = vsyncpa [#allocation12], 1
    %1714 = vsyncpa [#allocation4], 1

</llo_original>
